<compile_context>
chip_gen: v5e
topology: v5e:2x2
jax: 0.10.0
libtpu: 0.0.40
codegen_flags: <defaults>
</compile_context>

<pallas_src>
import math

import jax
import jax.numpy as jnp
from jax.experimental import pallas as pl
from jax.experimental.pallas import tpu as pltpu

D_MODEL = 32
NHEAD = 4
DIM_FF = 64
LN_EPS = 1e-5


def _layer_norm(x, gamma, beta):
    mu = jnp.mean(x, axis=-1, keepdims=True)
    var = jnp.mean((x - mu) ** 2, axis=-1, keepdims=True)
    return (x - mu) * jax.lax.rsqrt(var + LN_EPS) * gamma + beta


def _encoder_layer_kernel(src_ref, pos_ref,
                          wqk_ref, wv_ref, wo_ref, w1_ref, w2_ref,
                          bqk_ref, b1_ref, vec_ref,
                          out_ref):
    """One grid step = one (Bt, S, D) batch tile.

    Row-wise ops run on the folded (Bt*S, D) view; only the attention score /
    value contractions keep the per-sequence structure (batched over Bt).
    All weights are pre-transposed so every matmul is a plain `x @ W`.
    """
    Bt, S, D = src_ref.shape
    H = NHEAD
    hd = D // H
    cdt = wqk_ref.dtype                       # MXU compute dtype (f32 or bf16)

    x3 = src_ref[...].astype(jnp.float32)                     # (Bt, S, D)
    qk_in = (x3 + pos_ref[...].astype(jnp.float32)).reshape(Bt * S, D)
    x2 = x3.reshape(Bt * S, D)                                 # folded rows

    vec = vec_ref[...]                                         # (8, D) fused vectors
    bv, bo, b2 = vec[0:1], vec[1:2], vec[2:3]
    g1, be1, g2, be2 = vec[3:4], vec[4:5], vec[5:6], vec[6:7]

    # --- fused Q/K projection + V projection (pre-transposed weights) ---
    qk = jnp.dot(qk_in.astype(cdt), wqk_ref[...],
                 preferred_element_type=jnp.float32) + bqk_ref[...]   # (Bt*S, 2D)
    v2 = jnp.dot(x2.astype(cdt), wv_ref[...],
                 preferred_element_type=jnp.float32) + bv             # (Bt*S, D)

    scale = 1.0 / math.sqrt(hd)
    q3 = (qk[:, :D] * scale).reshape(Bt, S, D)
    k3 = qk[:, D:].reshape(Bt, S, D)
    v3 = v2.reshape(Bt, S, D)

    # --- multi-head attention, batched over the batch tile ---
    head_outs = []
    for h in range(H):                                         # static unroll, H=4
        sl = slice(h * hd, (h + 1) * hd)
        s = jnp.einsum('bqd,bkd->bqk',
                       q3[..., sl].astype(cdt), k3[..., sl].astype(cdt),
                       preferred_element_type=jnp.float32)     # (Bt, S, S)
        s = s - jnp.max(s, axis=-1, keepdims=True)
        p = jnp.exp(s)
        p = p * pl.reciprocal(jnp.sum(p, axis=-1, keepdims=True), approx=True)
        oh = jnp.einsum('bqk,bkd->bqd',
                        p.astype(cdt), v3[..., sl].astype(cdt),
                        preferred_element_type=jnp.float32)    # (Bt, S, hd)
        head_outs.append(oh.reshape(Bt * S, hd))
    attn = jnp.concatenate(head_outs, axis=-1)                 # (Bt*S, D)

    attn = jnp.dot(attn.astype(cdt), wo_ref[...],
                   preferred_element_type=jnp.float32) + bo

    # --- residual + LayerNorm1 ---
    y = _layer_norm(x2 + attn, g1, be1)

    # --- FFN: linear2(relu(linear1(y))) ---
    h1 = jnp.dot(y.astype(cdt), w1_ref[...],
                 preferred_element_type=jnp.float32) + b1_ref[...]
    h1 = jnp.maximum(h1, 0.0)
    ffn = jnp.dot(h1.astype(cdt), w2_ref[...],
                  preferred_element_type=jnp.float32) + b2

    # --- residual + LayerNorm2 ---
    z = _layer_norm(y + ffn, g2, be2)

    out_ref[...] = z.reshape(Bt, S, D).astype(out_ref.dtype)


def transformer_encoder_layer(src, pos, params, *, batch_tile=8,
                              matmul_dtype=jnp.float32):
    """src, pos: (B, S, D) float32.  Returns (B, S, D).

    batch_tile: number of batch elements per grid step (Bt).  Per step the
    pipelined data blocks cost 2(buffers) * 3(arrays) * Bt*S*D*4B + ~40 KiB of
    weights, so even large Bt stays far below the v7x 32 MiB scoped-VMEM
    default; keep the resulting grid extent >= 2 on v7x so both TensorCores
    get work (the batch axis is marked "parallel").
    """
    B, S, D = src.shape

    # Largest divisor of B not exceeding batch_tile (keeps the grid exact).
    bt = max(d for d in range(1, min(batch_tile, B) + 1) if B % d == 0)
    grid = (B // bt,)

    # ---- host-side weight prep: transpose / split / fuse (one-time) ----
    wqkv = params["wqkv"]                         # (3D, D)  PyTorch in_proj_weight
    bqkv = params["bqkv"]                         # (1, 3D)
    wqk_T = jnp.concatenate([wqkv[:D].T, wqkv[D:2 * D].T], axis=1)   # (D, 2D)
    wv_T = wqkv[2 * D:].T                         # (D, D)
    wo_T = params["wo"].T                         # (D, D)
    w1_T = params["w1"].T                         # (D, F)
    w2_T = params["w2"].T                         # (F, D)
    bqk = bqkv[:, :2 * D]                         # (1, 2D)
    b1 = params["b1"]                             # (1, F)
    # fused (1, D) vectors: bv, bo, b2, g1, be1, g2, be2 (+ zero pad row)
    vec_d = jnp.concatenate([
        bqkv[:, 2 * D:], params["bo"], params["b2"],
        params["g1"], params["be1"], params["g2"], params["be2"],
        jnp.zeros((1, D), jnp.float32)], axis=0)  # (8, D)

    mm = lambda w: w.astype(matmul_dtype)         # bf16 MXU inputs on v6e/v7x
    weight_args = [mm(wqk_T), mm(wv_T), mm(wo_T), mm(w1_T), mm(w2_T),
                   bqk, b1, vec_d]

    data_spec = pl.BlockSpec((bt, S, D), lambda b: (b, 0, 0))
    weight_specs = [pl.BlockSpec(w.shape, lambda b: (0, 0)) for w in weight_args]

    return pl.pallas_call(
        _encoder_layer_kernel,
        out_shape=jax.ShapeDtypeStruct((B, S, D), src.dtype),
        grid_spec=pltpu.PrefetchScalarGridSpec(
            num_scalar_prefetch=0,
            grid=grid,
            in_specs=[data_spec, data_spec] + weight_specs,
            out_specs=data_spec,
        ),
        compiler_params=pltpu.CompilerParams(
            dimension_semantics=("parallel",)),
    )(src, pos, *weight_args)


def _reference(src, pos, p):
    """Pure-JAX replica of the PyTorch forward_post path (eval mode)."""
    D, H = D_MODEL, NHEAD
    hd = D // H
    x = src
    qk = x + pos
    q = qk @ p["wqkv"][:D].T + p["bqkv"][0, :D]
    k = qk @ p["wqkv"][D:2 * D].T + p["bqkv"][0, D:2 * D]
    v = x @ p["wqkv"][2 * D:].T + p["bqkv"][0, 2 * D:]

    def split(t):  # (B,S,D) -> (B,H,S,hd)
        B, S, _ = t.shape
        return t.reshape(B, S, H, hd).transpose(0, 2, 1, 3)

    qh, kh, vh = split(q), split(k), split(v)
    s = jnp.einsum("bhqd,bhkd->bhqk", qh * (1.0 / math.sqrt(hd)), kh)
    pattn = jax.nn.softmax(s, axis=-1)
    o = jnp.einsum("bhqk,bhkd->bhqd", pattn, vh)
    B, S = src.shape[:2]
    o = o.transpose(0, 2, 1, 3).reshape(B, S, D)
    attn_out = o @ p["wo"].T + p["bo"][0]

    def ln(t, g, b):
        mu = jnp.mean(t, axis=-1, keepdims=True)
        var = jnp.mean((t - mu) ** 2, axis=-1, keepdims=True)
        return (t - mu) * jax.lax.rsqrt(var + LN_EPS) * g[0] + b[0]

    x = ln(x + attn_out, p["g1"], p["be1"])
    ffn = jnp.maximum(x @ p["w1"].T + p["b1"][0], 0.0) @ p["w2"].T + p["b2"][0]
    x = ln(x + ffn, p["g2"], p["be2"])
    return x


def _init_params(key):
    ks = jax.random.split(key, 8)
    D, F = D_MODEL, DIM_FF
    sc = 0.1
    return {
        "wqkv": jax.random.normal(ks[0], (3 * D, D), jnp.float32) * sc,
        "bqkv": jax.random.normal(ks[1], (1, 3 * D), jnp.float32) * sc,
        "wo":   jax.random.normal(ks[2], (D, D), jnp.float32) * sc,
        "bo":   jax.random.normal(ks[3], (1, D), jnp.float32) * sc,
        "w1":   jax.random.normal(ks[4], (F, D), jnp.float32) * sc,
        "b1":   jax.random.normal(ks[5], (1, F), jnp.float32) * sc,
        "w2":   jax.random.normal(ks[6], (D, F), jnp.float32) * sc,
        "b2":   jax.random.normal(ks[7], (1, D), jnp.float32) * sc,
        "g1":   jnp.ones((1, D), jnp.float32),
        "be1":  jnp.zeros((1, D), jnp.float32),
        "g2":   jnp.ones((1, D), jnp.float32),
        "be2":  jnp.zeros((1, D), jnp.float32),
    }


if __name__ == "__main__":
    key = jax.random.PRNGKey(0)
    kp, kx, kpos = jax.random.split(key, 3)

    B, S, D = 8, 8, D_MODEL
    src = jax.random.normal(kx, (B, S, D), jnp.float32)
    pos = jax.random.normal(kpos, (B, S, D), jnp.float32)
    params = _init_params(kp)

    ref = _reference(src, pos, params)

    # f32 MXU path (grid of 2 steps x 4-element batch tiles).
    out = transformer_encoder_layer(src, pos, params, batch_tile=4)
    out = jax.block_until_ready(out)
    assert out.shape == (B, S, D)
    assert jnp.allclose(out, ref, atol=1e-2, rtol=1e-2), (
        f"f32 path: max abs diff {jnp.max(jnp.abs(out - ref))}")

    # bf16-input MXU path (v6e/v7x suggestion); loose sanity bound for the
    # reduced-precision matmuls (accumulation stays f32).
    out_bf16 = transformer_encoder_layer(src, pos, params, batch_tile=4,
                                         matmul_dtype=jnp.bfloat16)
    out_bf16 = jax.block_until_ready(out_bf16)
    assert jnp.allclose(out_bf16, ref, atol=0.25, rtol=0.25), (
        f"bf16 path: max abs diff {jnp.max(jnp.abs(out_bf16 - ref))}")

    print("KERNEL_OK")
</pallas_src>

<mosaic_0001>
module attributes {stable_mosaic.version = 11 : i64} {
  func.func @_encoder_layer_kernel(%arg0: i32, %arg1: memref<4x8x32xf32, #tpu.memory_space<vmem>>, %arg2: memref<4x8x32xf32, #tpu.memory_space<vmem>>, %arg3: memref<32x64xf32, #tpu.memory_space<vmem>>, %arg4: memref<32x32xf32, #tpu.memory_space<vmem>>, %arg5: memref<32x32xf32, #tpu.memory_space<vmem>>, %arg6: memref<32x64xf32, #tpu.memory_space<vmem>>, %arg7: memref<64x32xf32, #tpu.memory_space<vmem>>, %arg8: memref<1x64xf32, #tpu.memory_space<vmem>>, %arg9: memref<1x64xf32, #tpu.memory_space<vmem>>, %arg10: memref<8x32xf32, #tpu.memory_space<vmem>>, %arg11: memref<4x8x32xf32, #tpu.memory_space<vmem>>) attributes {dimension_semantics = [#tpu.dimension_semantics<parallel>], iteration_bounds = array<i64: 2>, scalar_prefetch = 0 : i64, scratch_operands = 0 : i64, tpu.core_type = #tpu.core_type<tc>, window_params = [{transform_indices = @transform_0, window_bounds = array<i64: 4, 8, 32>}, {transform_indices = @transform_1, window_bounds = array<i64: 4, 8, 32>}, {pipeline_mode = #tpu.pipeline_mode<synchronous>, transform_indices = @transform_2, window_bounds = array<i64: 32, 64>}, {pipeline_mode = #tpu.pipeline_mode<synchronous>, transform_indices = @transform_3, window_bounds = array<i64: 32, 32>}, {pipeline_mode = #tpu.pipeline_mode<synchronous>, transform_indices = @transform_4, window_bounds = array<i64: 32, 32>}, {pipeline_mode = #tpu.pipeline_mode<synchronous>, transform_indices = @transform_5, window_bounds = array<i64: 32, 64>}, {pipeline_mode = #tpu.pipeline_mode<synchronous>, transform_indices = @transform_6, window_bounds = array<i64: 64, 32>}, {pipeline_mode = #tpu.pipeline_mode<synchronous>, transform_indices = @transform_7, window_bounds = array<i64: 1, 64>}, {pipeline_mode = #tpu.pipeline_mode<synchronous>, transform_indices = @transform_8, window_bounds = array<i64: 1, 64>}, {pipeline_mode = #tpu.pipeline_mode<synchronous>, transform_indices = @transform_9, window_bounds = array<i64: 8, 32>}, {transform_indices = @transform_10, window_bounds = array<i64: 4, 8, 32>}]} {
    %c0 = arith.constant 0 : index
    %c0_0 = arith.constant 0 : index
    %c0_1 = arith.constant 0 : index
    %0 = vector.load %arg1[%c0, %c0_0, %c0_1] : memref<4x8x32xf32, #tpu.memory_space<vmem>>, vector<4x8x32xf32>
    %c0_2 = arith.constant 0 : index
    %c0_3 = arith.constant 0 : index
    %c0_4 = arith.constant 0 : index
    %1 = vector.load %arg2[%c0_2, %c0_3, %c0_4] : memref<4x8x32xf32, #tpu.memory_space<vmem>>, vector<4x8x32xf32>
    %2 = arith.addf %0, %1 : vector<4x8x32xf32>
    %3 = vector.shape_cast %2 : vector<4x8x32xf32> to vector<32x32xf32>
    %4 = vector.shape_cast %0 : vector<4x8x32xf32> to vector<32x32xf32>
    %c0_5 = arith.constant 0 : index
    %c0_6 = arith.constant 0 : index
    %5 = vector.load %arg10[%c0_5, %c0_6] : memref<8x32xf32, #tpu.memory_space<vmem>>, vector<8x32xf32>
    %6 = vector.extract_strided_slice %5 {offsets = [0, 0], sizes = [1, 32], strides = [1, 1]} : vector<8x32xf32> to vector<1x32xf32>
    %7 = vector.extract_strided_slice %5 {offsets = [1, 0], sizes = [1, 32], strides = [1, 1]} : vector<8x32xf32> to vector<1x32xf32>
    %8 = vector.extract_strided_slice %5 {offsets = [2, 0], sizes = [1, 32], strides = [1, 1]} : vector<8x32xf32> to vector<1x32xf32>
    %9 = vector.extract_strided_slice %5 {offsets = [3, 0], sizes = [1, 32], strides = [1, 1]} : vector<8x32xf32> to vector<1x32xf32>
    %10 = vector.extract_strided_slice %5 {offsets = [4, 0], sizes = [1, 32], strides = [1, 1]} : vector<8x32xf32> to vector<1x32xf32>
    %11 = vector.extract_strided_slice %5 {offsets = [5, 0], sizes = [1, 32], strides = [1, 1]} : vector<8x32xf32> to vector<1x32xf32>
    %12 = vector.extract_strided_slice %5 {offsets = [6, 0], sizes = [1, 32], strides = [1, 1]} : vector<8x32xf32> to vector<1x32xf32>
    %c0_7 = arith.constant 0 : index
    %c0_8 = arith.constant 0 : index
    %13 = vector.load %arg3[%c0_7, %c0_8] : memref<32x64xf32, #tpu.memory_space<vmem>>, vector<32x64xf32>
    %cst = arith.constant dense<0.000000e+00> : vector<32x64xf32>
    %14 = tpu.matmul %3, %13, %cst {dimension_numbers = #tpu.dot_dimension_numbers<[1], [0], [0], [1], [0, 0, 1, 1], [], []>} : vector<32x32xf32>, vector<32x64xf32>, vector<32x64xf32> -> vector<32x64xf32>
    %c0_9 = arith.constant 0 : index
    %c0_10 = arith.constant 0 : index
    %15 = vector.load %arg8[%c0_9, %c0_10] : memref<1x64xf32, #tpu.memory_space<vmem>>, vector<1x64xf32>
    %16 = vector.broadcast %15 : vector<1x64xf32> to vector<32x64xf32>
    %17 = arith.addf %14, %16 : vector<32x64xf32>
    %c0_11 = arith.constant 0 : index
    %c0_12 = arith.constant 0 : index
    %18 = vector.load %arg4[%c0_11, %c0_12] : memref<32x32xf32, #tpu.memory_space<vmem>>, vector<32x32xf32>
    %cst_13 = arith.constant dense<0.000000e+00> : vector<32x32xf32>
    %19 = tpu.matmul %4, %18, %cst_13 {dimension_numbers = #tpu.dot_dimension_numbers<[1], [0], [0], [1], [0, 0, 1, 1], [], []>} : vector<32x32xf32>, vector<32x32xf32>, vector<32x32xf32> -> vector<32x32xf32>
    %20 = vector.broadcast %6 : vector<1x32xf32> to vector<32x32xf32>
    %21 = arith.addf %19, %20 : vector<32x32xf32>
    %22 = vector.extract_strided_slice %17 {offsets = [0, 0], sizes = [32, 32], strides = [1, 1]} : vector<32x64xf32> to vector<32x32xf32>
    %cst_14 = arith.constant 0.353553385 : f32
    %23 = vector.broadcast %cst_14 : f32 to vector<32x32xf32>
    %24 = arith.mulf %22, %23 : vector<32x32xf32>
    %25 = vector.shape_cast %24 : vector<32x32xf32> to vector<4x8x32xf32>
    %26 = vector.extract_strided_slice %17 {offsets = [0, 32], sizes = [32, 32], strides = [1, 1]} : vector<32x64xf32> to vector<32x32xf32>
    %27 = vector.shape_cast %26 : vector<32x32xf32> to vector<4x8x32xf32>
    %28 = vector.shape_cast %21 : vector<32x32xf32> to vector<4x8x32xf32>
    %29 = vector.extract_strided_slice %25 {offsets = [0, 0, 0], sizes = [4, 8, 8], strides = [1, 1, 1]} : vector<4x8x32xf32> to vector<4x8x8xf32>
    %30 = vector.extract_strided_slice %27 {offsets = [0, 0, 0], sizes = [4, 8, 8], strides = [1, 1, 1]} : vector<4x8x32xf32> to vector<4x8x8xf32>
    "tpu.trace_start"() <{level = 10 : i32, message = "bqd,bkd->bqk"}> : () -> ()
    %cst_15 = arith.constant dense<0.000000e+00> : vector<4x8x8xf32>
    %31 = tpu.matmul %29, %30, %cst_15 {dimension_numbers = #tpu.dot_dimension_numbers<[2], [2], [1], [1], [0, 0, 0, 1, 1, 1], [0], [0]>} : vector<4x8x8xf32>, vector<4x8x8xf32>, vector<4x8x8xf32> -> vector<4x8x8xf32>
    "tpu.trace_stop"() : () -> ()
    %cst_16 = arith.constant dense<0xFF800000> : vector<4x8xf32>
    %32 = vector.multi_reduction <maximumf>, %31, %cst_16 [2] : vector<4x8x8xf32> to vector<4x8xf32>
    %33 = vector.shape_cast %32 : vector<4x8xf32> to vector<4x8x1xf32>
    %34 = vector.broadcast %33 : vector<4x8x1xf32> to vector<4x8x8xf32>
    %35 = arith.subf %31, %34 : vector<4x8x8xf32>
    %36 = math.exp %35 : vector<4x8x8xf32>
    %cst_17 = arith.constant dense<0.000000e+00> : vector<4x8xf32>
    %37 = vector.multi_reduction <add>, %36, %cst_17 [2] : vector<4x8x8xf32> to vector<4x8xf32>
    %38 = vector.shape_cast %37 : vector<4x8xf32> to vector<4x8x1xf32>
    %39 = tpu.reciprocal %38 {approx = true} : vector<4x8x1xf32> -> vector<4x8x1xf32>
    %40 = vector.broadcast %39 : vector<4x8x1xf32> to vector<4x8x8xf32>
    %41 = arith.mulf %36, %40 : vector<4x8x8xf32>
    %42 = vector.extract_strided_slice %28 {offsets = [0, 0, 0], sizes = [4, 8, 8], strides = [1, 1, 1]} : vector<4x8x32xf32> to vector<4x8x8xf32>
    "tpu.trace_start"() <{level = 10 : i32, message = "bqk,bkd->bqd"}> : () -> ()
    %cst_18 = arith.constant dense<0.000000e+00> : vector<4x8x8xf32>
    %43 = tpu.matmul %41, %42, %cst_18 {dimension_numbers = #tpu.dot_dimension_numbers<[2], [1], [1], [2], [0, 0, 0, 1, 1, 2], [0], [0]>} : vector<4x8x8xf32>, vector<4x8x8xf32>, vector<4x8x8xf32> -> vector<4x8x8xf32>
    "tpu.trace_stop"() : () -> ()
    %44 = vector.shape_cast %43 : vector<4x8x8xf32> to vector<32x8xf32>
    %45 = vector.extract_strided_slice %25 {offsets = [0, 0, 8], sizes = [4, 8, 8], strides = [1, 1, 1]} : vector<4x8x32xf32> to vector<4x8x8xf32>
    %46 = vector.extract_strided_slice %27 {offsets = [0, 0, 8], sizes = [4, 8, 8], strides = [1, 1, 1]} : vector<4x8x32xf32> to vector<4x8x8xf32>
    "tpu.trace_start"() <{level = 10 : i32, message = "bqd,bkd->bqk"}> : () -> ()
    %cst_19 = arith.constant dense<0.000000e+00> : vector<4x8x8xf32>
    %47 = tpu.matmul %45, %46, %cst_19 {dimension_numbers = #tpu.dot_dimension_numbers<[2], [2], [1], [1], [0, 0, 0, 1, 1, 1], [0], [0]>} : vector<4x8x8xf32>, vector<4x8x8xf32>, vector<4x8x8xf32> -> vector<4x8x8xf32>
    "tpu.trace_stop"() : () -> ()
    %cst_20 = arith.constant dense<0xFF800000> : vector<4x8xf32>
    %48 = vector.multi_reduction <maximumf>, %47, %cst_20 [2] : vector<4x8x8xf32> to vector<4x8xf32>
    %49 = vector.shape_cast %48 : vector<4x8xf32> to vector<4x8x1xf32>
    %50 = vector.broadcast %49 : vector<4x8x1xf32> to vector<4x8x8xf32>
    %51 = arith.subf %47, %50 : vector<4x8x8xf32>
    %52 = math.exp %51 : vector<4x8x8xf32>
    %cst_21 = arith.constant dense<0.000000e+00> : vector<4x8xf32>
    %53 = vector.multi_reduction <add>, %52, %cst_21 [2] : vector<4x8x8xf32> to vector<4x8xf32>
    %54 = vector.shape_cast %53 : vector<4x8xf32> to vector<4x8x1xf32>
    %55 = tpu.reciprocal %54 {approx = true} : vector<4x8x1xf32> -> vector<4x8x1xf32>
    %56 = vector.broadcast %55 : vector<4x8x1xf32> to vector<4x8x8xf32>
    %57 = arith.mulf %52, %56 : vector<4x8x8xf32>
    %58 = vector.extract_strided_slice %28 {offsets = [0, 0, 8], sizes = [4, 8, 8], strides = [1, 1, 1]} : vector<4x8x32xf32> to vector<4x8x8xf32>
    "tpu.trace_start"() <{level = 10 : i32, message = "bqk,bkd->bqd"}> : () -> ()
    %cst_22 = arith.constant dense<0.000000e+00> : vector<4x8x8xf32>
    %59 = tpu.matmul %57, %58, %cst_22 {dimension_numbers = #tpu.dot_dimension_numbers<[2], [1], [1], [2], [0, 0, 0, 1, 1, 2], [0], [0]>} : vector<4x8x8xf32>, vector<4x8x8xf32>, vector<4x8x8xf32> -> vector<4x8x8xf32>
    "tpu.trace_stop"() : () -> ()
    %60 = vector.shape_cast %59 : vector<4x8x8xf32> to vector<32x8xf32>
    %61 = vector.extract_strided_slice %25 {offsets = [0, 0, 16], sizes = [4, 8, 8], strides = [1, 1, 1]} : vector<4x8x32xf32> to vector<4x8x8xf32>
    %62 = vector.extract_strided_slice %27 {offsets = [0, 0, 16], sizes = [4, 8, 8], strides = [1, 1, 1]} : vector<4x8x32xf32> to vector<4x8x8xf32>
    "tpu.trace_start"() <{level = 10 : i32, message = "bqd,bkd->bqk"}> : () -> ()
    %cst_23 = arith.constant dense<0.000000e+00> : vector<4x8x8xf32>
    %63 = tpu.matmul %61, %62, %cst_23 {dimension_numbers = #tpu.dot_dimension_numbers<[2], [2], [1], [1], [0, 0, 0, 1, 1, 1], [0], [0]>} : vector<4x8x8xf32>, vector<4x8x8xf32>, vector<4x8x8xf32> -> vector<4x8x8xf32>
    "tpu.trace_stop"() : () -> ()
    %cst_24 = arith.constant dense<0xFF800000> : vector<4x8xf32>
    %64 = vector.multi_reduction <maximumf>, %63, %cst_24 [2] : vector<4x8x8xf32> to vector<4x8xf32>
    %65 = vector.shape_cast %64 : vector<4x8xf32> to vector<4x8x1xf32>
    %66 = vector.broadcast %65 : vector<4x8x1xf32> to vector<4x8x8xf32>
    %67 = arith.subf %63, %66 : vector<4x8x8xf32>
    %68 = math.exp %67 : vector<4x8x8xf32>
    %cst_25 = arith.constant dense<0.000000e+00> : vector<4x8xf32>
    %69 = vector.multi_reduction <add>, %68, %cst_25 [2] : vector<4x8x8xf32> to vector<4x8xf32>
    %70 = vector.shape_cast %69 : vector<4x8xf32> to vector<4x8x1xf32>
    %71 = tpu.reciprocal %70 {approx = true} : vector<4x8x1xf32> -> vector<4x8x1xf32>
    %72 = vector.broadcast %71 : vector<4x8x1xf32> to vector<4x8x8xf32>
    %73 = arith.mulf %68, %72 : vector<4x8x8xf32>
    %74 = vector.extract_strided_slice %28 {offsets = [0, 0, 16], sizes = [4, 8, 8], strides = [1, 1, 1]} : vector<4x8x32xf32> to vector<4x8x8xf32>
    "tpu.trace_start"() <{level = 10 : i32, message = "bqk,bkd->bqd"}> : () -> ()
    %cst_26 = arith.constant dense<0.000000e+00> : vector<4x8x8xf32>
    %75 = tpu.matmul %73, %74, %cst_26 {dimension_numbers = #tpu.dot_dimension_numbers<[2], [1], [1], [2], [0, 0, 0, 1, 1, 2], [0], [0]>} : vector<4x8x8xf32>, vector<4x8x8xf32>, vector<4x8x8xf32> -> vector<4x8x8xf32>
    "tpu.trace_stop"() : () -> ()
    %76 = vector.shape_cast %75 : vector<4x8x8xf32> to vector<32x8xf32>
    %77 = vector.extract_strided_slice %25 {offsets = [0, 0, 24], sizes = [4, 8, 8], strides = [1, 1, 1]} : vector<4x8x32xf32> to vector<4x8x8xf32>
    %78 = vector.extract_strided_slice %27 {offsets = [0, 0, 24], sizes = [4, 8, 8], strides = [1, 1, 1]} : vector<4x8x32xf32> to vector<4x8x8xf32>
    "tpu.trace_start"() <{level = 10 : i32, message = "bqd,bkd->bqk"}> : () -> ()
    %cst_27 = arith.constant dense<0.000000e+00> : vector<4x8x8xf32>
    %79 = tpu.matmul %77, %78, %cst_27 {dimension_numbers = #tpu.dot_dimension_numbers<[2], [2], [1], [1], [0, 0, 0, 1, 1, 1], [0], [0]>} : vector<4x8x8xf32>, vector<4x8x8xf32>, vector<4x8x8xf32> -> vector<4x8x8xf32>
    "tpu.trace_stop"() : () -> ()
    %cst_28 = arith.constant dense<0xFF800000> : vector<4x8xf32>
    %80 = vector.multi_reduction <maximumf>, %79, %cst_28 [2] : vector<4x8x8xf32> to vector<4x8xf32>
    %81 = vector.shape_cast %80 : vector<4x8xf32> to vector<4x8x1xf32>
    %82 = vector.broadcast %81 : vector<4x8x1xf32> to vector<4x8x8xf32>
    %83 = arith.subf %79, %82 : vector<4x8x8xf32>
    %84 = math.exp %83 : vector<4x8x8xf32>
    %cst_29 = arith.constant dense<0.000000e+00> : vector<4x8xf32>
    %85 = vector.multi_reduction <add>, %84, %cst_29 [2] : vector<4x8x8xf32> to vector<4x8xf32>
    %86 = vector.shape_cast %85 : vector<4x8xf32> to vector<4x8x1xf32>
    %87 = tpu.reciprocal %86 {approx = true} : vector<4x8x1xf32> -> vector<4x8x1xf32>
    %88 = vector.broadcast %87 : vector<4x8x1xf32> to vector<4x8x8xf32>
    %89 = arith.mulf %84, %88 : vector<4x8x8xf32>
    %90 = vector.extract_strided_slice %28 {offsets = [0, 0, 24], sizes = [4, 8, 8], strides = [1, 1, 1]} : vector<4x8x32xf32> to vector<4x8x8xf32>
    "tpu.trace_start"() <{level = 10 : i32, message = "bqk,bkd->bqd"}> : () -> ()
    %cst_30 = arith.constant dense<0.000000e+00> : vector<4x8x8xf32>
    %91 = tpu.matmul %89, %90, %cst_30 {dimension_numbers = #tpu.dot_dimension_numbers<[2], [1], [1], [2], [0, 0, 0, 1, 1, 2], [0], [0]>} : vector<4x8x8xf32>, vector<4x8x8xf32>, vector<4x8x8xf32> -> vector<4x8x8xf32>
    "tpu.trace_stop"() : () -> ()
    %92 = vector.shape_cast %91 : vector<4x8x8xf32> to vector<32x8xf32>
    %93 = tpu.concatenate %44, %60, %76, %92 in 1 : vector<32x8xf32>, vector<32x8xf32>, vector<32x8xf32>, vector<32x8xf32> -> vector<32x32xf32>
    %c0_31 = arith.constant 0 : index
    %c0_32 = arith.constant 0 : index
    %94 = vector.load %arg5[%c0_31, %c0_32] : memref<32x32xf32, #tpu.memory_space<vmem>>, vector<32x32xf32>
    %cst_33 = arith.constant dense<0.000000e+00> : vector<32x32xf32>
    %95 = tpu.matmul %93, %94, %cst_33 {dimension_numbers = #tpu.dot_dimension_numbers<[1], [0], [0], [1], [0, 0, 1, 1], [], []>} : vector<32x32xf32>, vector<32x32xf32>, vector<32x32xf32> -> vector<32x32xf32>
    %96 = vector.broadcast %7 : vector<1x32xf32> to vector<32x32xf32>
    %97 = arith.addf %95, %96 : vector<32x32xf32>
    %98 = arith.addf %4, %97 : vector<32x32xf32>
    %cst_34 = arith.constant dense<0.000000e+00> : vector<32xf32>
    %99 = vector.multi_reduction <add>, %98, %cst_34 [1] : vector<32x32xf32> to vector<32xf32>
    %100 = vector.shape_cast %99 : vector<32xf32> to vector<32x1xf32>
    %cst_35 = arith.constant 3.200000e+01 : f32
    %101 = vector.broadcast %cst_35 : f32 to vector<32x1xf32>
    %102 = arith.divf %100, %101 : vector<32x1xf32>
    %103 = vector.broadcast %102 : vector<32x1xf32> to vector<32x32xf32>
    %104 = arith.subf %98, %103 : vector<32x32xf32>
    %105 = arith.mulf %104, %104 : vector<32x32xf32>
    %cst_36 = arith.constant dense<0.000000e+00> : vector<32xf32>
    %106 = vector.multi_reduction <add>, %105, %cst_36 [1] : vector<32x32xf32> to vector<32xf32>
    %107 = vector.shape_cast %106 : vector<32xf32> to vector<32x1xf32>
    %cst_37 = arith.constant 3.200000e+01 : f32
    %108 = vector.broadcast %cst_37 : f32 to vector<32x1xf32>
    %109 = arith.divf %107, %108 : vector<32x1xf32>
    %110 = vector.broadcast %102 : vector<32x1xf32> to vector<32x32xf32>
    %111 = arith.subf %98, %110 : vector<32x32xf32>
    %cst_38 = arith.constant 9.99999974E-6 : f32
    %112 = vector.broadcast %cst_38 : f32 to vector<32x1xf32>
    %113 = arith.addf %109, %112 : vector<32x1xf32>
    %114 = math.rsqrt %113 : vector<32x1xf32>
    %115 = vector.broadcast %114 : vector<32x1xf32> to vector<32x32xf32>
    %116 = arith.mulf %111, %115 : vector<32x32xf32>
    %117 = vector.broadcast %9 : vector<1x32xf32> to vector<32x32xf32>
    %118 = arith.mulf %116, %117 : vector<32x32xf32>
    %119 = vector.broadcast %10 : vector<1x32xf32> to vector<32x32xf32>
    %120 = arith.addf %118, %119 : vector<32x32xf32>
    %c0_39 = arith.constant 0 : index
    %c0_40 = arith.constant 0 : index
    %121 = vector.load %arg6[%c0_39, %c0_40] : memref<32x64xf32, #tpu.memory_space<vmem>>, vector<32x64xf32>
    %cst_41 = arith.constant dense<0.000000e+00> : vector<32x64xf32>
    %122 = tpu.matmul %120, %121, %cst_41 {dimension_numbers = #tpu.dot_dimension_numbers<[1], [0], [0], [1], [0, 0, 1, 1], [], []>} : vector<32x32xf32>, vector<32x64xf32>, vector<32x64xf32> -> vector<32x64xf32>
    %c0_42 = arith.constant 0 : index
    %c0_43 = arith.constant 0 : index
    %123 = vector.load %arg9[%c0_42, %c0_43] : memref<1x64xf32, #tpu.memory_space<vmem>>, vector<1x64xf32>
    %124 = vector.broadcast %123 : vector<1x64xf32> to vector<32x64xf32>
    %125 = arith.addf %122, %124 : vector<32x64xf32>
    %cst_44 = arith.constant 0.000000e+00 : f32
    %126 = vector.broadcast %cst_44 : f32 to vector<32x64xf32>
    %127 = arith.maximumf %125, %126 : vector<32x64xf32>
    %c0_45 = arith.constant 0 : index
    %c0_46 = arith.constant 0 : index
    %128 = vector.load %arg7[%c0_45, %c0_46] : memref<64x32xf32, #tpu.memory_space<vmem>>, vector<64x32xf32>
    %cst_47 = arith.constant dense<0.000000e+00> : vector<32x32xf32>
    %129 = tpu.matmul %127, %128, %cst_47 {dimension_numbers = #tpu.dot_dimension_numbers<[1], [0], [0], [1], [0, 0, 1, 1], [], []>} : vector<32x64xf32>, vector<64x32xf32>, vector<32x32xf32> -> vector<32x32xf32>
    %130 = vector.broadcast %8 : vector<1x32xf32> to vector<32x32xf32>
    %131 = arith.addf %129, %130 : vector<32x32xf32>
    %132 = arith.addf %120, %131 : vector<32x32xf32>
    %cst_48 = arith.constant dense<0.000000e+00> : vector<32xf32>
    %133 = vector.multi_reduction <add>, %132, %cst_48 [1] : vector<32x32xf32> to vector<32xf32>
    %134 = vector.shape_cast %133 : vector<32xf32> to vector<32x1xf32>
    %cst_49 = arith.constant 3.200000e+01 : f32
    %135 = vector.broadcast %cst_49 : f32 to vector<32x1xf32>
    %136 = arith.divf %134, %135 : vector<32x1xf32>
    %137 = vector.broadcast %136 : vector<32x1xf32> to vector<32x32xf32>
    %138 = arith.subf %132, %137 : vector<32x32xf32>
    %139 = arith.mulf %138, %138 : vector<32x32xf32>
    %cst_50 = arith.constant dense<0.000000e+00> : vector<32xf32>
    %140 = vector.multi_reduction <add>, %139, %cst_50 [1] : vector<32x32xf32> to vector<32xf32>
    %141 = vector.shape_cast %140 : vector<32xf32> to vector<32x1xf32>
    %cst_51 = arith.constant 3.200000e+01 : f32
    %142 = vector.broadcast %cst_51 : f32 to vector<32x1xf32>
    %143 = arith.divf %141, %142 : vector<32x1xf32>
    %144 = vector.broadcast %136 : vector<32x1xf32> to vector<32x32xf32>
    %145 = arith.subf %132, %144 : vector<32x32xf32>
    %cst_52 = arith.constant 9.99999974E-6 : f32
    %146 = vector.broadcast %cst_52 : f32 to vector<32x1xf32>
    %147 = arith.addf %143, %146 : vector<32x1xf32>
    %148 = math.rsqrt %147 : vector<32x1xf32>
    %149 = vector.broadcast %148 : vector<32x1xf32> to vector<32x32xf32>
    %150 = arith.mulf %145, %149 : vector<32x32xf32>
    %151 = vector.broadcast %11 : vector<1x32xf32> to vector<32x32xf32>
    %152 = arith.mulf %150, %151 : vector<32x32xf32>
    %153 = vector.broadcast %12 : vector<1x32xf32> to vector<32x32xf32>
    %154 = arith.addf %152, %153 : vector<32x32xf32>
    %155 = vector.shape_cast %154 : vector<32x32xf32> to vector<4x8x32xf32>
    %c0_53 = arith.constant 0 : index
    %c0_54 = arith.constant 0 : index
    %c0_55 = arith.constant 0 : index
    %156 = vector.load %arg11[%c0_53, %c0_54, %c0_55] : memref<4x8x32xf32, #tpu.memory_space<vmem>>, vector<4x8x32xf32>
    tpu.vector_store %arg11[%c0_53, %c0_54, %c0_55], %155 {strides = array<i32>} : memref<4x8x32xf32, #tpu.memory_space<vmem>>, vector<4x8x32xf32>,
    return
  }
  func.func @transform_0(%arg0: i32) -> (i32, i32, i32) {
    %c0_i32 = arith.constant 0 : i32
    %c0_i32_0 = arith.constant 0 : i32
    %c0_i32_1 = arith.constant 0 : i32
    return %arg0, %c0_i32, %c0_i32_0 : i32, i32, i32
  }
  func.func @transform_1(%arg0: i32) -> (i32, i32, i32) {
    %c0_i32 = arith.constant 0 : i32
    %c0_i32_0 = arith.constant 0 : i32
    %c0_i32_1 = arith.constant 0 : i32
    return %arg0, %c0_i32, %c0_i32_0 : i32, i32, i32
  }
  func.func @transform_2(%arg0: i32) -> (i32, i32) {
    %c0_i32 = arith.constant 0 : i32
    %c0_i32_0 = arith.constant 0 : i32
    %c0_i32_1 = arith.constant 0 : i32
    return %c0_i32, %c0_i32_0 : i32, i32
  }
  func.func @transform_3(%arg0: i32) -> (i32, i32) {
    %c0_i32 = arith.constant 0 : i32
    %c0_i32_0 = arith.constant 0 : i32
    %c0_i32_1 = arith.constant 0 : i32
    return %c0_i32, %c0_i32_0 : i32, i32
  }
  func.func @transform_4(%arg0: i32) -> (i32, i32) {
    %c0_i32 = arith.constant 0 : i32
    %c0_i32_0 = arith.constant 0 : i32
    %c0_i32_1 = arith.constant 0 : i32
    return %c0_i32, %c0_i32_0 : i32, i32
  }
  func.func @transform_5(%arg0: i32) -> (i32, i32) {
    %c0_i32 = arith.constant 0 : i32
    %c0_i32_0 = arith.constant 0 : i32
    %c0_i32_1 = arith.constant 0 : i32
    return %c0_i32, %c0_i32_0 : i32, i32
  }
  func.func @transform_6(%arg0: i32) -> (i32, i32) {
    %c0_i32 = arith.constant 0 : i32
    %c0_i32_0 = arith.constant 0 : i32
    %c0_i32_1 = arith.constant 0 : i32
    return %c0_i32, %c0_i32_0 : i32, i32
  }
  func.func @transform_7(%arg0: i32) -> (i32, i32) {
    %c0_i32 = arith.constant 0 : i32
    %c0_i32_0 = arith.constant 0 : i32
    %c0_i32_1 = arith.constant 0 : i32
    return %c0_i32, %c0_i32_0 : i32, i32
  }
  func.func @transform_8(%arg0: i32) -> (i32, i32) {
    %c0_i32 = arith.constant 0 : i32
    %c0_i32_0 = arith.constant 0 : i32
    %c0_i32_1 = arith.constant 0 : i32
    return %c0_i32, %c0_i32_0 : i32, i32
  }
  func.func @transform_9(%arg0: i32) -> (i32, i32) {
    %c0_i32 = arith.constant 0 : i32
    %c0_i32_0 = arith.constant 0 : i32
    %c0_i32_1 = arith.constant 0 : i32
    return %c0_i32, %c0_i32_0 : i32, i32
  }
  func.func @transform_10(%arg0: i32) -> (i32, i32, i32) {
    %c0_i32 = arith.constant 0 : i32
    %c0_i32_0 = arith.constant 0 : i32
    %c0_i32_1 = arith.constant 0 : i32
    return %arg0, %c0_i32, %c0_i32_0 : i32, i32, i32
  }
}

</mosaic_0001>

<llo_original>
// kernel: tpu_custom_call.1
$region0: #{tpu_custom_call.1}
  #allocation0 [shape = 'u32[]', space=smem, size = 0x4, offset = 0x4, fixed_abs, tag = 'smem constant byte address 0x4 - core index']
  #allocation1 [shape = 'u32[72,128]{1,0:T(1,128)}', space=vmem, size = 0x9000, scoped, tag = 'internal scratch']
  %s0 = inlined_call_operand.vmem [shape: f32[8,8,32], index: 0, kind: input, shape index: {}]
  %s1 = inlined_call_operand.hbm [shape: f32[8,8,32], index: 1, kind: input, shape index: {}]
  %s2 = inlined_call_operand.vmem [shape: f32[32,64], index: 2, kind: input, shape index: {}]
  %s3 = inlined_call_operand.hbm [shape: f32[32,32], index: 3, kind: input, shape index: {}]
  %s4 = inlined_call_operand.hbm [shape: f32[32,32], index: 4, kind: input, shape index: {}]
  %s5 = inlined_call_operand.hbm [shape: f32[32,64], index: 5, kind: input, shape index: {}]
  %s6 = inlined_call_operand.vmem [shape: f32[64,32], index: 6, kind: input, shape index: {}]
  %s7 = inlined_call_operand.vmem [shape: f32[1,64], index: 7, kind: input, shape index: {}]
  %s8 = inlined_call_operand.vmem [shape: f32[1,64], index: 8, kind: input, shape index: {}]
  %s9 = inlined_call_operand.hbm [shape: f32[8,32], index: 9, kind: input, shape index: {}]
  %s10 = inlined_call_operand.hbm [shape: f32[8,8,32], index: 10, kind: output, shape index: {}]
  %s11 = sld [smem:[#allocation0]]
  $region93: #{tpu_custom_call.1} parent=0
    _
  %s13 = ssub.s32 1, %s11
  %s14 = scalar_select 0, %s13, %s11
  $region1: #{tpu_custom_call.1} parent=0
    #allocation2 [shape = 'u8[32768]{0}', space=vmem, size = 0x8000, scoped, tag = 'input window, operand 1']
    #allocation3 [shape = 's32[2]{0}', space=sflag, size = 0x8, scoped, tag = 'scoped memory for tpu_custom_call.1']
    #allocation4 [shape = 's32[2]{0}', space=sflag, size = 0x8, scoped, tag = 'scoped memory for tpu_custom_call.1']
    #allocation5 [shape = 'u8[16384]{0}', space=vmem, size = 0x4000, scoped, tag = 'input window, operand 3, single buffered']
    #allocation6 [shape = 's32[1]{0}', space=sflag, size = 0x4, scoped, tag = 'scoped memory for tpu_custom_call.1']
    #allocation7 [shape = 'u8[16384]{0}', space=vmem, size = 0x4000, scoped, tag = 'input window, operand 4, single buffered']
    #allocation8 [shape = 'u8[16384]{0}', space=vmem, size = 0x4000, scoped, tag = 'input window, operand 5, single buffered']
    #allocation9 [shape = 's32[1]{0}', space=sflag, size = 0x4, scoped, tag = 'scoped memory for tpu_custom_call.1']
    #allocation10 [shape = 'u8[4096]{0}', space=vmem, size = 0x1000, scoped, tag = 'input window, operand 9, single buffered']
    #allocation11 [shape = 'u8[32768]{0}', space=vmem, size = 0x8000, scoped, tag = 'output window, operand 0']
    %15 = vsyncpa [#allocation3], 0
    %s16 = scalar_lea.sflag [#allocation3], 1
    %17 = vsyncpa %s16, 0
    %18 = vsyncpa [#allocation6], 0
    %19 = vsyncpa [#allocation9], 0
    %20 = vsyncpa [#allocation4], 0
    %s21 = scalar_lea.sflag [#allocation4], 1
    %22 = vsyncpa %s21, 0
    loop: start=0, step=1, limit=4
    $region2: #{tpu_custom_call.1} parent=1 // loop_pre_header
      _
    $region3: #{tpu_custom_call.1} parent=1 // loop_header
      %s24 = sphi 0, %s28
      %p25 = scmp.ge.s32.totalorder %s24, 4
      %s34 = sphi 0, %s36
      %s37 = sphi 0, %s34
      %s38 = sphi 0, %s37
      %s54 = sphi 0, %s38
      %s60 = sphi 0, %s62
      %s63 = sphi 0, %s60
      %s64 = sphi 0, %s63
      %s80 = sphi 0, %s64
      %s84 = sphi 0, %s84
      %s86 = sphi 0, %s84
      %s87 = sphi 0, %s86
      %s101 = sphi 0, %s87
      %s105 = sphi 0, %s105
      %s107 = sphi 0, %s105
      %s108 = sphi 0, %s107
      %s122 = sphi 0, %s108
      %s126 = sphi 0, %s126
      %s128 = sphi 0, %s126
      %s129 = sphi 0, %s128
      %s143 = sphi 0, %s129
      %s147 = sphi 0, %s147
      %s149 = sphi 0, %s147
      %s150 = sphi 0, %s149
      %s164 = sphi 0, %s150
      %s168 = sphi 0, %s168
      %s170 = sphi 0, %s168
      %s171 = sphi 0, %s170
      %s185 = sphi 0, %s171
      %s189 = sphi 0, %s189
      %s191 = sphi 0, %s189
      %s192 = sphi 0, %s191
      %s206 = sphi 0, %s192
      %s210 = sphi 0, %s210
      %s212 = sphi 0, %s210
      %s213 = sphi 0, %s212
      %s227 = sphi 0, %s213
      %s231 = sphi 0, %s231
      %s233 = sphi 0, %s231
      %s234 = sphi 0, %s233
      %s248 = sphi 0, %s234
      %s254 = sphi 0, %s256
      %s257 = sphi 0, %s254
      %s258 = sphi 0, %s257
      %s274 = sphi 0, %s258
    $region4: #{tpu_custom_call.1} parent=1 // loop_header_branch
      %27 = sbr.rel (%p25) target = $region8
    $region5: #{tpu_custom_call.1} parent=1 // loop_body
      %s29 = ssub.s32 %s24, 1
      %s30 = ssub.s32 %s24, 2
      %s31 = sadd.s32 %s24, 1
      %s32 = ssub.s32 %s24, %s31
      %p33 = scmp.eq.s32.totalorder %s32, 0
      %s35 = sadd.s32 %s34, 1
      %s36 = scalar_select %p33, %s34, %s35
      %p39 = pneg %p33
      %p40 = scmp.eq.s32.totalorder %s24, 1
      %p41 = por %p39, %p40
      %p42 = scmp.ne.s32.totalorder %s34, %s37
      %p43 = scmp.eq.s32.totalorder %s24, 0
      %p44 = por %p42, %p43
      %p45 = scmp.ne.s32.totalorder %s34, %s37
      %p46 = scmp.eq.s32.totalorder %s29, 1
      %p47 = por %p45, %p46
      %p48 = scmp.ne.s32.totalorder %s37, %s38
      %p49 = scmp.eq.s32.totalorder %s29, 0
      %p50 = por %p48, %p49
      %p51 = scmp.ne.s32.totalorder %s37, %s38
      %p52 = scmp.eq.s32.totalorder %s30, 1
      %p53 = por %p51, %p52
      %p55 = scmp.ne.s32.totalorder %s38, %s54
      %p56 = scmp.eq.s32.totalorder %s30, 0
      %p57 = por %p55, %p56
      %s58 = ssub.s32 %s24, %s31
      %p59 = scmp.eq.s32.totalorder %s58, 0
      %s61 = sadd.s32 %s60, 1
      %s62 = scalar_select %p59, %s60, %s61
      %p65 = pneg %p59
      %p66 = scmp.eq.s32.totalorder %s24, 1
      %p67 = por %p65, %p66
      %p68 = scmp.ne.s32.totalorder %s60, %s63
      %p69 = scmp.eq.s32.totalorder %s24, 0
      %p70 = por %p68, %p69
      %p71 = scmp.ne.s32.totalorder %s60, %s63
      %p72 = scmp.eq.s32.totalorder %s29, 1
      %p73 = por %p71, %p72
      %p74 = scmp.ne.s32.totalorder %s63, %s64
      %p75 = scmp.eq.s32.totalorder %s29, 0
      %p76 = por %p74, %p75
      %p77 = scmp.ne.s32.totalorder %s63, %s64
      %p78 = scmp.eq.s32.totalorder %s30, 1
      %p79 = por %p77, %p78
      %p81 = scmp.ne.s32.totalorder %s64, %s80
      %p82 = scmp.eq.s32.totalorder %s30, 0
      %p83 = por %p81, %p82
      %s85 = sadd.s32 %s84, 1
      %p88 = scmp.eq.s32.totalorder %s24, 1
      %p89 = scmp.ne.s32.totalorder %s84, %s86
      %p90 = scmp.eq.s32.totalorder %s24, 0
      %p91 = por %p89, %p90
      %p92 = scmp.ne.s32.totalorder %s84, %s86
      %p93 = scmp.eq.s32.totalorder %s29, 1
      %p94 = por %p92, %p93
      %p95 = scmp.ne.s32.totalorder %s86, %s87
      %p96 = scmp.eq.s32.totalorder %s29, 0
      %p97 = por %p95, %p96
      %p98 = scmp.ne.s32.totalorder %s86, %s87
      %p99 = scmp.eq.s32.totalorder %s30, 1
      %p100 = por %p98, %p99
      %p102 = scmp.ne.s32.totalorder %s87, %s101
      %p103 = scmp.eq.s32.totalorder %s30, 0
      %p104 = por %p102, %p103
      %s106 = sadd.s32 %s105, 1
      %p109 = scmp.eq.s32.totalorder %s24, 1
      %p110 = scmp.ne.s32.totalorder %s105, %s107
      %p111 = scmp.eq.s32.totalorder %s24, 0
      %p112 = por %p110, %p111
      %p113 = scmp.ne.s32.totalorder %s105, %s107
      %p114 = scmp.eq.s32.totalorder %s29, 1
      %p115 = por %p113, %p114
      %p116 = scmp.ne.s32.totalorder %s107, %s108
      %p117 = scmp.eq.s32.totalorder %s29, 0
      %p118 = por %p116, %p117
      %p119 = scmp.ne.s32.totalorder %s107, %s108
      %p120 = scmp.eq.s32.totalorder %s30, 1
      %p121 = por %p119, %p120
      %p123 = scmp.ne.s32.totalorder %s108, %s122
      %p124 = scmp.eq.s32.totalorder %s30, 0
      %p125 = por %p123, %p124
      %s127 = sadd.s32 %s126, 1
      %p130 = scmp.eq.s32.totalorder %s24, 1
      %p131 = scmp.ne.s32.totalorder %s126, %s128
      %p132 = scmp.eq.s32.totalorder %s24, 0
      %p133 = por %p131, %p132
      %p134 = scmp.ne.s32.totalorder %s126, %s128
      %p135 = scmp.eq.s32.totalorder %s29, 1
      %p136 = por %p134, %p135
      %p137 = scmp.ne.s32.totalorder %s128, %s129
      %p138 = scmp.eq.s32.totalorder %s29, 0
      %p139 = por %p137, %p138
      %p140 = scmp.ne.s32.totalorder %s128, %s129
      %p141 = scmp.eq.s32.totalorder %s30, 1
      %p142 = por %p140, %p141
      %p144 = scmp.ne.s32.totalorder %s129, %s143
      %p145 = scmp.eq.s32.totalorder %s30, 0
      %p146 = por %p144, %p145
      %s148 = sadd.s32 %s147, 1
      %p151 = scmp.eq.s32.totalorder %s24, 1
      %p152 = scmp.ne.s32.totalorder %s147, %s149
      %p153 = scmp.eq.s32.totalorder %s24, 0
      %p154 = por %p152, %p153
      %p155 = scmp.ne.s32.totalorder %s147, %s149
      %p156 = scmp.eq.s32.totalorder %s29, 1
      %p157 = por %p155, %p156
      %p158 = scmp.ne.s32.totalorder %s149, %s150
      %p159 = scmp.eq.s32.totalorder %s29, 0
      %p160 = por %p158, %p159
      %p161 = scmp.ne.s32.totalorder %s149, %s150
      %p162 = scmp.eq.s32.totalorder %s30, 1
      %p163 = por %p161, %p162
      %p165 = scmp.ne.s32.totalorder %s150, %s164
      %p166 = scmp.eq.s32.totalorder %s30, 0
      %p167 = por %p165, %p166
      %s169 = sadd.s32 %s168, 1
      %p172 = scmp.eq.s32.totalorder %s24, 1
      %p173 = scmp.ne.s32.totalorder %s168, %s170
      %p174 = scmp.eq.s32.totalorder %s24, 0
      %p175 = por %p173, %p174
      %p176 = scmp.ne.s32.totalorder %s168, %s170
      %p177 = scmp.eq.s32.totalorder %s29, 1
      %p178 = por %p176, %p177
      %p179 = scmp.ne.s32.totalorder %s170, %s171
      %p180 = scmp.eq.s32.totalorder %s29, 0
      %p181 = por %p179, %p180
      %p182 = scmp.ne.s32.totalorder %s170, %s171
      %p183 = scmp.eq.s32.totalorder %s30, 1
      %p184 = por %p182, %p183
      %p186 = scmp.ne.s32.totalorder %s171, %s185
      %p187 = scmp.eq.s32.totalorder %s30, 0
      %p188 = por %p186, %p187
      %s190 = sadd.s32 %s189, 1
      %p193 = scmp.eq.s32.totalorder %s24, 1
      %p194 = scmp.ne.s32.totalorder %s189, %s191
      %p195 = scmp.eq.s32.totalorder %s24, 0
      %p196 = por %p194, %p195
      %p197 = scmp.ne.s32.totalorder %s189, %s191
      %p198 = scmp.eq.s32.totalorder %s29, 1
      %p199 = por %p197, %p198
      %p200 = scmp.ne.s32.totalorder %s191, %s192
      %p201 = scmp.eq.s32.totalorder %s29, 0
      %p202 = por %p200, %p201
      %p203 = scmp.ne.s32.totalorder %s191, %s192
      %p204 = scmp.eq.s32.totalorder %s30, 1
      %p205 = por %p203, %p204
      %p207 = scmp.ne.s32.totalorder %s192, %s206
      %p208 = scmp.eq.s32.totalorder %s30, 0
      %p209 = por %p207, %p208
      %s211 = sadd.s32 %s210, 1
      %p214 = scmp.eq.s32.totalorder %s24, 1
      %p215 = scmp.ne.s32.totalorder %s210, %s212
      %p216 = scmp.eq.s32.totalorder %s24, 0
      %p217 = por %p215, %p216
      %p218 = scmp.ne.s32.totalorder %s210, %s212
      %p219 = scmp.eq.s32.totalorder %s29, 1
      %p220 = por %p218, %p219
      %p221 = scmp.ne.s32.totalorder %s212, %s213
      %p222 = scmp.eq.s32.totalorder %s29, 0
      %p223 = por %p221, %p222
      %p224 = scmp.ne.s32.totalorder %s212, %s213
      %p225 = scmp.eq.s32.totalorder %s30, 1
      %p226 = por %p224, %p225
      %p228 = scmp.ne.s32.totalorder %s213, %s227
      %p229 = scmp.eq.s32.totalorder %s30, 0
      %p230 = por %p228, %p229
      %s232 = sadd.s32 %s231, 1
      %p235 = scmp.eq.s32.totalorder %s24, 1
      %p236 = scmp.ne.s32.totalorder %s231, %s233
      %p237 = scmp.eq.s32.totalorder %s24, 0
      %p238 = por %p236, %p237
      %p239 = scmp.ne.s32.totalorder %s231, %s233
      %p240 = scmp.eq.s32.totalorder %s29, 1
      %p241 = por %p239, %p240
      %p242 = scmp.ne.s32.totalorder %s233, %s234
      %p243 = scmp.eq.s32.totalorder %s29, 0
      %p244 = por %p242, %p243
      %p245 = scmp.ne.s32.totalorder %s233, %s234
      %p246 = scmp.eq.s32.totalorder %s30, 1
      %p247 = por %p245, %p246
      %p249 = scmp.ne.s32.totalorder %s234, %s248
      %p250 = scmp.eq.s32.totalorder %s30, 0
      %p251 = por %p249, %p250
      %s252 = ssub.s32 %s24, %s31
      %p253 = scmp.eq.s32.totalorder %s252, 0
      %s255 = sadd.s32 %s254, 1
      %s256 = scalar_select %p253, %s254, %s255
      %p259 = pneg %p253
      %p260 = scmp.eq.s32.totalorder %s24, 1
      %p261 = por %p259, %p260
      %p262 = scmp.ne.s32.totalorder %s254, %s257
      %p263 = scmp.eq.s32.totalorder %s24, 0
      %p264 = por %p262, %p263
      %p265 = scmp.ne.s32.totalorder %s254, %s257
      %p266 = scmp.eq.s32.totalorder %s29, 1
      %p267 = por %p265, %p266
      %p268 = scmp.ne.s32.totalorder %s257, %s258
      %p269 = scmp.eq.s32.totalorder %s29, 0
      %p270 = por %p268, %p269
      %p271 = scmp.ne.s32.totalorder %s257, %s258
      %p272 = scmp.eq.s32.totalorder %s30, 1
      %p273 = por %p271, %p272
      %p275 = scmp.ne.s32.totalorder %s258, %s274
      %p276 = scmp.eq.s32.totalorder %s30, 0
      %p277 = por %p275, %p276
      %p278 = scmp.le.s32.totalorder 1, %s24
      %p279 = scmp.lt.s32.totalorder %s24, 3
      %p280 = pnand %p278, %p279
      %p281 = pneg %p280
      // Predicated region
      $region9: #{tpu_custom_call.1} parent=5 // pred_check
        _
      $region10: #{tpu_custom_call.1} parent=5 // pred_check_branch
        %283 = sbr.rel (%p280) target = $region12
      $region11: #{tpu_custom_call.1} parent=5 // pred_region
        %s284 = ssub.s32 %s24, 1
        // Predicated region
        $region13: #{tpu_custom_call.1} parent=11 // pred_check
          %p285 = pneg %p97
        $region14: #{tpu_custom_call.1} parent=11 // pred_check_branch
          %287 = sbr.rel (%p285) target = $region16
        $region15: #{tpu_custom_call.1} parent=11 // pred_region
          _
        $region16: #{tpu_custom_call.1} parent=11 // pred_fallthru
          _
        // Predicated region
        $region17: #{tpu_custom_call.1} parent=11 // pred_check
          %p288 = pneg %p118
        $region18: #{tpu_custom_call.1} parent=11 // pred_check_branch
          %290 = sbr.rel (%p288) target = $region20
        $region19: #{tpu_custom_call.1} parent=11 // pred_region
          %292 = vsyncadd [#allocation6], 0
          %s293 = sshll.u32 %s3, 4
          %s294 = int_to_ptr.hbm [resolvable:$true] %s293
          %s295 = sshll.u32 [#allocation5], 4
          %s296 = int_to_ptr.vmem [resolvable:$true] %s295
          %301 = dma.hbm_to_vmem [thread:$0]  %s294, 512, %s296, [#allocation6], 128, 128, 8
        $region20: #{tpu_custom_call.1} parent=11 // pred_fallthru
          _
        // Predicated region
        $region21: #{tpu_custom_call.1} parent=11 // pred_check
          %p302 = pneg %p139
        $region22: #{tpu_custom_call.1} parent=11 // pred_check_branch
          %304 = sbr.rel (%p302) target = $region24
        $region23: #{tpu_custom_call.1} parent=11 // pred_region
          %306 = vsyncadd [#allocation6], 0
          %s307 = sshll.u32 %s4, 4
          %s308 = int_to_ptr.hbm [resolvable:$true] %s307
          %s309 = sshll.u32 [#allocation7], 4
          %s310 = int_to_ptr.vmem [resolvable:$true] %s309
          %315 = dma.hbm_to_vmem [thread:$0]  %s308, 512, %s310, [#allocation6], 128, 128, 8
        $region24: #{tpu_custom_call.1} parent=11 // pred_fallthru
          _
        // Predicated region
        $region25: #{tpu_custom_call.1} parent=11 // pred_check
          %p316 = pneg %p160
        $region26: #{tpu_custom_call.1} parent=11 // pred_check_branch
          %318 = sbr.rel (%p316) target = $region28
        $region27: #{tpu_custom_call.1} parent=11 // pred_region
          %320 = vsyncadd [#allocation9], 0
          %s321 = sshll.u32 %s5, 4
          %s322 = int_to_ptr.hbm [resolvable:$true] %s321
          %s323 = sshll.u32 [#allocation8], 4
          %s324 = int_to_ptr.vmem [resolvable:$true] %s323
          %329 = dma.hbm_to_vmem [thread:$0]  %s322, 512, %s324, [#allocation9], 128, 128, 8
        $region28: #{tpu_custom_call.1} parent=11 // pred_fallthru
          _
        // Predicated region
        $region29: #{tpu_custom_call.1} parent=11 // pred_check
          %p330 = pneg %p181
        $region30: #{tpu_custom_call.1} parent=11 // pred_check_branch
          %332 = sbr.rel (%p330) target = $region32
        $region31: #{tpu_custom_call.1} parent=11 // pred_region
          _
        $region32: #{tpu_custom_call.1} parent=11 // pred_fallthru
          _
        // Predicated region
        $region33: #{tpu_custom_call.1} parent=11 // pred_check
          %p333 = pneg %p202
        $region34: #{tpu_custom_call.1} parent=11 // pred_check_branch
          %335 = sbr.rel (%p333) target = $region36
        $region35: #{tpu_custom_call.1} parent=11 // pred_region
          _
        $region36: #{tpu_custom_call.1} parent=11 // pred_fallthru
          _
        // Predicated region
        $region37: #{tpu_custom_call.1} parent=11 // pred_check
          %p336 = pneg %p223
        $region38: #{tpu_custom_call.1} parent=11 // pred_check_branch
          %338 = sbr.rel (%p336) target = $region40
        $region39: #{tpu_custom_call.1} parent=11 // pred_region
          _
        $region40: #{tpu_custom_call.1} parent=11 // pred_fallthru
          _
        // Predicated region
        $region41: #{tpu_custom_call.1} parent=11 // pred_check
          %p339 = pneg %p244
        $region42: #{tpu_custom_call.1} parent=11 // pred_check_branch
          %341 = sbr.rel (%p339) target = $region44
        $region43: #{tpu_custom_call.1} parent=11 // pred_region
          %343 = vsyncadd [#allocation9], 0
          %s345 = sshll.u32 %s9, 4
          %s346 = int_to_ptr.hbm [resolvable:$true] %s345
          %s347 = sshll.u32 [#allocation10], 4
          %s348 = int_to_ptr.vmem [resolvable:$true] %s347
          %350 = dma.hbm_to_vmem [thread:$0]  %s346, 128, %s348, [#allocation9]
        $region44: #{tpu_custom_call.1} parent=11 // pred_fallthru
          _
      $region12: #{tpu_custom_call.1} parent=5 // pred_fallthru
        _
      %p351 = scmp.lt.s32.totalorder %s24, 2
      // Predicated region
      $region45: #{tpu_custom_call.1} parent=5 // pred_check
        %p352 = pneg %p351
      $region46: #{tpu_custom_call.1} parent=5 // pred_check_branch
        %354 = sbr.rel (%p352) target = $region48
      $region47: #{tpu_custom_call.1} parent=5 // pred_region
        // Predicated region
        $region49: #{tpu_custom_call.1} parent=47 // pred_check
          %p355 = pneg %p44
        $region50: #{tpu_custom_call.1} parent=47 // pred_check_branch
          %357 = sbr.rel (%p355) target = $region52
        $region51: #{tpu_custom_call.1} parent=47 // pred_region
          %s358 = smul.u32 4, %s24
          %p359 = scmp.lt.s32.totalorder %s358, 7
          %s360 = scalar_select %p359, %s358, 7
          %s361 = smul.addr %s360, 8
          %s362 = scalar_lea.vmem %s0, %s361
          %s363 = smul.u32 4, %s24
        $region52: #{tpu_custom_call.1} parent=47 // pred_fallthru
          _
        // Predicated region
        $region53: #{tpu_custom_call.1} parent=47 // pred_check
          %p364 = pneg %p70
        $region54: #{tpu_custom_call.1} parent=47 // pred_check_branch
          %366 = sbr.rel (%p364) target = $region56
        $region55: #{tpu_custom_call.1} parent=47 // pred_region
          %s367 = sand.u32 %s60, 1
          %s368 = scalar_lea.sflag [#allocation3], %s367
          %s369 = sand.u32 %s60, 1
          %s370 = smul.addr %s369, 32
          %s371 = scalar_lea.vmem [#allocation2], %s370
          %s372 = smul.u32 4, %s24
          %374 = vsyncadd %s368, 0
          %s375 = smul.addr %s372, 8
          %s376 = scalar_lea.hbm %s1, %s375
          %s377 = sshll.u32 %s376, 4
          %s378 = int_to_ptr.hbm [resolvable:$true] %s377
          %s379 = sshll.u32 %s371, 4
          %s380 = int_to_ptr.vmem [resolvable:$true] %s379
          %385 = dma.hbm_to_vmem [thread:$0]  %s378, 512, %s380, %s368, 128, 128, 8
        $region56: #{tpu_custom_call.1} parent=47 // pred_fallthru
          _
      $region48: #{tpu_custom_call.1} parent=5 // pred_fallthru
        _
      %p386 = scmp.le.s32.totalorder 1, %s24
      %p387 = scmp.lt.s32.totalorder %s24, 3
      %p388 = pnand %p386, %p387
      %p389 = pneg %p388
      // Predicated region
      $region57: #{tpu_custom_call.1} parent=5 // pred_check
        _
      $region58: #{tpu_custom_call.1} parent=5 // pred_check_branch
        %391 = sbr.rel (%p388) target = $region60
      $region59: #{tpu_custom_call.1} parent=5 // pred_region
        %s392 = ssub.s32 %s24, 1
        %s393 = sand.u32 %s63, 1
        %s394 = scalar_lea.sflag [#allocation3], %s393
        %s395 = sand.u32 %s63, 1
        %s396 = smul.addr %s395, 32
        %s397 = scalar_lea.vmem [#allocation2], %s396
        // Predicated region
        $region61: #{tpu_custom_call.1} parent=59 // pred_check
          %p398 = pneg %p76
        $region62: #{tpu_custom_call.1} parent=59 // pred_check_branch
          %400 = sbr.rel (%p398) target = $region64
        $region63: #{tpu_custom_call.1} parent=59 // pred_region
          %402 = dma.done %s394, 512
        $region64: #{tpu_custom_call.1} parent=59 // pred_fallthru
          _
        // Predicated region
        $region65: #{tpu_custom_call.1} parent=59 // pred_check
          %p403 = pneg %p118
        $region66: #{tpu_custom_call.1} parent=59 // pred_check_branch
          %405 = sbr.rel (%p403) target = $region68
        $region67: #{tpu_custom_call.1} parent=59 // pred_region
          %407 = dma.done [#allocation6], 512
        $region68: #{tpu_custom_call.1} parent=59 // pred_fallthru
          _
        // Predicated region
        $region69: #{tpu_custom_call.1} parent=59 // pred_check
          %p408 = pneg %p139
        $region70: #{tpu_custom_call.1} parent=59 // pred_check_branch
          %410 = sbr.rel (%p408) target = $region72
        $region71: #{tpu_custom_call.1} parent=59 // pred_region
          %412 = dma.done [#allocation6], 512
        $region72: #{tpu_custom_call.1} parent=59 // pred_fallthru
          _
        // Predicated region
        $region73: #{tpu_custom_call.1} parent=59 // pred_check
          %p413 = pneg %p160
        $region74: #{tpu_custom_call.1} parent=59 // pred_check_branch
          %415 = sbr.rel (%p413) target = $region76
        $region75: #{tpu_custom_call.1} parent=59 // pred_region
          %417 = dma.done [#allocation9], 512
        $region76: #{tpu_custom_call.1} parent=59 // pred_fallthru
          _
        // Predicated region
        $region77: #{tpu_custom_call.1} parent=59 // pred_check
          %p418 = pneg %p244
        $region78: #{tpu_custom_call.1} parent=59 // pred_check_branch
          %420 = sbr.rel (%p418) target = $region80
        $region79: #{tpu_custom_call.1} parent=59 // pred_region
          %422 = dma.done [#allocation9], 128
        $region80: #{tpu_custom_call.1} parent=59 // pred_fallthru
          _
        %s423 = smul.u32 4, %s29
        %p424 = scmp.lt.s32.totalorder %s423, 7
        %s425 = scalar_select %p424, %s423, 7
        %s426 = smul.addr %s425, 8
        %s427 = scalar_lea.vmem %s0, %s426
        %p428 = pneg %p50
        %p429 = pneg %p47
        %s430 = sand.u32 %s63, 1
        %s431 = scalar_lea.sflag [#allocation3], %s430
        %s432 = sand.u32 %s63, 1
        %s433 = smul.addr %s432, 32
        %s434 = scalar_lea.vmem [#allocation2], %s433
        %p435 = pneg %p76
        %p436 = pneg %p73
        %p437 = pneg %p97
        %p438 = pneg %p94
        %p439 = pneg %p118
        %p440 = pneg %p115
        %p441 = pneg %p139
        %p442 = pneg %p136
        %p443 = pneg %p160
        %p444 = pneg %p157
        %p445 = pneg %p181
        %p446 = pneg %p178
        %p447 = pneg %p202
        %p448 = pneg %p199
        %p449 = pneg %p223
        %p450 = pneg %p220
        %p451 = pneg %p244
        %p452 = pneg %p241
        %p453 = pneg %p270
        %p454 = pneg %p267
        %s455 = sand.u32 %s257, 1
        %s456 = scalar_lea.sflag [#allocation4], %s455
        %s457 = sand.u32 %s257, 1
        %s458 = smul.addr %s457, 32
        %s459 = scalar_lea.vmem [#allocation11], %s458
        %s460 = smul.u32 4, %s29
        %p461 = scmp.lt.s32.totalorder %s460, 7
        %s462 = scalar_select %p461, %s460, 7
        %s463 = smul.addr %s462, 8
        %s464 = scalar_lea.vmem %s0, %s463
        %s465 = smul.u32 4, %s29
        %s466 = smul.u32 4, %s29
        %s467 = smul.u32 4, %s29
        %v468 = vld [vmem:[%s464] sm:$0xff]
        %v469 = vld [vmem:[%s464 + $0x8] sm:$0xff]
        %v470 = vld [vmem:[%s464 + $0x10] sm:$0xff]
        %v471 = vld [vmem:[%s464 + $0x18] sm:$0xff]
        %v472 = vld [vmem:[%s397] sm:$0xff]
        %v473 = vld [vmem:[%s397 + $0x8] sm:$0xff]
        %v474 = vld [vmem:[%s397 + $0x10] sm:$0xff]
        %v475 = vld [vmem:[%s397 + $0x18] sm:$0xff]
        %v476 = vadd.f32 %v468, %v472
        %v477 = vadd.f32 %v469, %v473
        %v478 = vadd.f32 %v470, %v474
        %v479 = vadd.f32 %v471, %v475
        %v480 = vld [vmem:[#allocation10] sm:$0xff]
        %v481 = vld [vmem:[%s2] sm:$0xff]
        %v482 = vld [vmem:[%s2 + $0x8] sm:$0xff]
        %v483 = vld [vmem:[%s2 + $0x10] sm:$0xff]
        %v484 = vld [vmem:[%s2 + $0x18] sm:$0xff]
        %v485 = vld [vmem:[%s7] sm:$0x1]
        %v487 = vperm.slane %v485, 0
        %vm489 = vcmask 261120
        %v491 = vsel %vm489, %v476, 0
        %v494 = vsel %vm489, %v477, 0
        %v497 = vsel %vm489, %v478, 0
        %v500 = vsel %vm489, %v479, 0
        %502 = vmatpush.msra.mxu0 0.0
        %503 = vmatpush.msra.mxu0 0.0
        %504 = vmatpush.msra.mxu0 0.0
        %505 = vmatpush.msra.mxu0 0.0
        %506 = vmatpush.msra.mxu0 0.0
        %507 = vmatpush.msra.mxu0 0.0
        %508 = vmatpush.msra.mxu0 0.0
        %509 = vmatpush.msra.mxu0 0.0
        %510 = vmatpush.msra.mxu0 0.0
        %511 = vmatpush.msra.mxu0 0.0
        %512 = vmatpush.msra.mxu0 0.0
        %513 = vmatpush.msra.mxu0 0.0
        %514 = vmatpush.msra.mxu0 %v484
        %515 = vmatpush.msra.mxu0 %v483
        %516 = vmatpush.msra.mxu0 %v482
        %517 = vmatpush.msra.mxu0 %v481
        %518 = vmatmul.f32.gmra.mxu0 %v491
        %v519 = vpop.f32.mrf.mxu0
        %v520 = vadd.f32 %v487, %v519
        %521 = vmatmul.f32.gmra.mxu0 %v494
        %v522 = vpop.f32.mrf.mxu0
        %v523 = vadd.f32 %v487, %v522
        %524 = vmatmul.f32.gmra.mxu0 %v497
        %v525 = vpop.f32.mrf.mxu0
        %v526 = vadd.f32 %v487, %v525
        %527 = vmatmul.f32.gmra.mxu0 %v500
        %v528 = vpop.f32.mrf.mxu0
        %v529 = vadd.f32 %v487, %v528
        %530 = vdwg.mxu0
        %v531 = vld [vmem:[#allocation5] sm:$0xff]
        %v532 = vld [vmem:[#allocation5 + $0x8] sm:$0xff]
        %v533 = vld [vmem:[#allocation5 + $0x10] sm:$0xff]
        %v534 = vld [vmem:[#allocation5 + $0x18] sm:$0xff]
        %v535 = vperm.slane %v480, 0
        %v537 = vsel %vm489, %v468, 0
        %v540 = vsel %vm489, %v469, 0
        %v543 = vsel %vm489, %v470, 0
        %v546 = vsel %vm489, %v471, 0
        %548 = vmatpush.msra.mxu0 0.0
        %549 = vmatpush.msra.mxu0 0.0
        %550 = vmatpush.msra.mxu0 0.0
        %551 = vmatpush.msra.mxu0 0.0
        %552 = vmatpush.msra.mxu0 0.0
        %553 = vmatpush.msra.mxu0 0.0
        %554 = vmatpush.msra.mxu0 0.0
        %555 = vmatpush.msra.mxu0 0.0
        %556 = vmatpush.msra.mxu0 0.0
        %557 = vmatpush.msra.mxu0 0.0
        %558 = vmatpush.msra.mxu0 0.0
        %559 = vmatpush.msra.mxu0 0.0
        %560 = vmatpush.msra.mxu0 %v534
        %561 = vmatpush.msra.mxu0 %v533
        %562 = vmatpush.msra.mxu0 %v532
        %563 = vmatpush.msra.mxu0 %v531
        %564 = vmatmul.f32.gmra.mxu0 %v537
        %v565 = vpop.f32.mrf.mxu0
        %v566 = vadd.f32 %v535, %v565
        %567 = vmatmul.f32.gmra.mxu0 %v540
        %v568 = vpop.f32.mrf.mxu0
        %v569 = vadd.f32 %v535, %v568
        %570 = vmatmul.f32.gmra.mxu0 %v543
        %v571 = vpop.f32.mrf.mxu0
        %v572 = vadd.f32 %v535, %v571
        %573 = vmatmul.f32.gmra.mxu0 %v546
        %v574 = vpop.f32.mrf.mxu0
        %v575 = vadd.f32 %v535, %v574
        %576 = vdwg.mxu0
        %v577 = vmul.f32 %v520, 0.35355338
        %v578 = vmul.f32 %v523, 0.35355338
        %v579 = vmul.f32 %v526, 0.35355338
        %v580 = vmul.f32 %v529, 0.35355338
        %582 = vrot.lane.b32.xlu0 %v520, 96
        %v583 = vpop.permute.xlu0 %582
        %vm584 = vcmask 64512
        %v586 = vsel %vm584, %v577, 0
        %v588 = vsel %vm584, %v583, 0
        %590 = vmatpush.xpose.msra.mxu0 0.0
        %591 = vmatpush.xpose.msra.mxu0 0.0
        %592 = vmatpush.xpose.msra.mxu0 0.0
        %593 = vmatpush.xpose.msra.mxu0 0.0
        %594 = vmatpush.xpose.msra.mxu0 0.0
        %595 = vmatpush.xpose.msra.mxu0 0.0
        %596 = vmatpush.xpose.msra.mxu0 0.0
        %597 = vmatpush.xpose.msra.mxu0 0.0
        %598 = vmatpush.xpose.msra.mxu0 0.0
        %599 = vmatpush.xpose.msra.mxu0 0.0
        %600 = vmatpush.xpose.msra.mxu0 0.0
        %601 = vmatpush.xpose.msra.mxu0 0.0
        %602 = vmatpush.xpose.msra.mxu0 0.0
        %603 = vmatpush.xpose.msra.mxu0 0.0
        %604 = vmatpush.xpose.msra.mxu0 0.0
        %605 = vmatpush.xpose.msra.mxu0 %v588
        %606 = vmatmul.f32.gmra.mxu0 %v586
        %v607 = vpop.f32.mrf.mxu0
        %v608 = vadd.f32 0.0, %v607
        %609 = vdwg.mxu0
        %611 = vrot.lane.b32.xlu0 %v523, 96
        %v612 = vpop.permute.xlu0 %611
        %v614 = vsel %vm584, %v578, 0
        %v616 = vsel %vm584, %v612, 0
        %618 = vmatpush.xpose.msra.mxu0 0.0
        %619 = vmatpush.xpose.msra.mxu0 0.0
        %620 = vmatpush.xpose.msra.mxu0 0.0
        %621 = vmatpush.xpose.msra.mxu0 0.0
        %622 = vmatpush.xpose.msra.mxu0 0.0
        %623 = vmatpush.xpose.msra.mxu0 0.0
        %624 = vmatpush.xpose.msra.mxu0 0.0
        %625 = vmatpush.xpose.msra.mxu0 0.0
        %626 = vmatpush.xpose.msra.mxu0 0.0
        %627 = vmatpush.xpose.msra.mxu0 0.0
        %628 = vmatpush.xpose.msra.mxu0 0.0
        %629 = vmatpush.xpose.msra.mxu0 0.0
        %630 = vmatpush.xpose.msra.mxu0 0.0
        %631 = vmatpush.xpose.msra.mxu0 0.0
        %632 = vmatpush.xpose.msra.mxu0 0.0
        %633 = vmatpush.xpose.msra.mxu0 %v616
        %634 = vmatmul.f32.gmra.mxu0 %v614
        %v635 = vpop.f32.mrf.mxu0
        %v636 = vadd.f32 0.0, %v635
        %637 = vdwg.mxu0
        %639 = vrot.lane.b32.xlu0 %v526, 96
        %v640 = vpop.permute.xlu0 %639
        %v642 = vsel %vm584, %v579, 0
        %v644 = vsel %vm584, %v640, 0
        %646 = vmatpush.xpose.msra.mxu0 0.0
        %647 = vmatpush.xpose.msra.mxu0 0.0
        %648 = vmatpush.xpose.msra.mxu0 0.0
        %649 = vmatpush.xpose.msra.mxu0 0.0
        %650 = vmatpush.xpose.msra.mxu0 0.0
        %651 = vmatpush.xpose.msra.mxu0 0.0
        %652 = vmatpush.xpose.msra.mxu0 0.0
        %653 = vmatpush.xpose.msra.mxu0 0.0
        %654 = vmatpush.xpose.msra.mxu0 0.0
        %655 = vmatpush.xpose.msra.mxu0 0.0
        %656 = vmatpush.xpose.msra.mxu0 0.0
        %657 = vmatpush.xpose.msra.mxu0 0.0
        %658 = vmatpush.xpose.msra.mxu0 0.0
        %659 = vmatpush.xpose.msra.mxu0 0.0
        %660 = vmatpush.xpose.msra.mxu0 0.0
        %661 = vmatpush.xpose.msra.mxu0 %v644
        %662 = vmatmul.f32.gmra.mxu0 %v642
        %v663 = vpop.f32.mrf.mxu0
        %v664 = vadd.f32 0.0, %v663
        %665 = vdwg.mxu0
        %667 = vrot.lane.b32.xlu0 %v529, 96
        %v668 = vpop.permute.xlu0 %667
        %v670 = vsel %vm584, %v580, 0
        %v672 = vsel %vm584, %v668, 0
        %674 = vmatpush.xpose.msra.mxu0 0.0
        %675 = vmatpush.xpose.msra.mxu0 0.0
        %676 = vmatpush.xpose.msra.mxu0 0.0
        %677 = vmatpush.xpose.msra.mxu0 0.0
        %678 = vmatpush.xpose.msra.mxu0 0.0
        %679 = vmatpush.xpose.msra.mxu0 0.0
        %680 = vmatpush.xpose.msra.mxu0 0.0
        %681 = vmatpush.xpose.msra.mxu0 0.0
        %682 = vmatpush.xpose.msra.mxu0 0.0
        %683 = vmatpush.xpose.msra.mxu0 0.0
        %684 = vmatpush.xpose.msra.mxu0 0.0
        %685 = vmatpush.xpose.msra.mxu0 0.0
        %686 = vmatpush.xpose.msra.mxu0 0.0
        %687 = vmatpush.xpose.msra.mxu0 0.0
        %688 = vmatpush.xpose.msra.mxu0 0.0
        %689 = vmatpush.xpose.msra.mxu0 %v672
        %690 = vmatmul.f32.gmra.mxu0 %v670
        %v691 = vpop.f32.mrf.mxu0
        %v692 = vadd.f32 0.0, %v691
        %693 = vdwg.mxu0
        %v694 = vsel %vm584, %v608, -inf
        %695 = vmax.xlane.f32.xlu0 %v694
        %v696 = vpop.xlane.xlu0 %695
        %v697 = vsel %vm584, %v636, -inf
        %698 = vmax.xlane.f32.xlu0 %v697
        %v699 = vpop.xlane.xlu0 %698
        %v700 = vsel %vm584, %v664, -inf
        %701 = vmax.xlane.f32.xlu0 %v700
        %v702 = vpop.xlane.xlu0 %701
        %v703 = vsel %vm584, %v692, -inf
        %704 = vmax.xlane.f32.xlu0 %v703
        %v705 = vpop.xlane.xlu0 %704
        %v706 = vsub.f32 %v608, %v696
        %v707 = vsub.f32 %v636, %v699
        %v708 = vsub.f32 %v664, %v702
        %v709 = vsub.f32 %v692, %v705
        %v710 = vmul.f32 %v706, 1.442695
        %v711 = vpow.pop %v710
        %v712 = vmul.f32 %v707, 1.442695
        %v713 = vpow.pop %v712
        %v714 = vmul.f32 %v708, 1.442695
        %v715 = vpow.pop %v714
        %v716 = vmul.f32 %v709, 1.442695
        %v717 = vpow.pop %v716
        %v718 = vsel %vm584, %v711, 0.0
        %719 = vadd.xlane.f32.xlu0 %v718
        %v720 = vpop.xlane.xlu0 %719
        %v721 = vsel %vm584, %v713, 0.0
        %722 = vadd.xlane.f32.xlu0 %v721
        %v723 = vpop.xlane.xlu0 %722
        %v724 = vsel %vm584, %v715, 0.0
        %725 = vadd.xlane.f32.xlu0 %v724
        %v726 = vpop.xlane.xlu0 %725
        %v727 = vsel %vm584, %v717, 0.0
        %728 = vadd.xlane.f32.xlu0 %v727
        %v729 = vpop.xlane.xlu0 %728
        %v730 = vrcp.pop %v720
        %v731 = vrcp.pop %v723
        %v732 = vrcp.pop %v726
        %v733 = vrcp.pop %v729
        %v734 = vmul.f32 %v711, %v730
        %v735 = vmul.f32 %v713, %v731
        %v736 = vmul.f32 %v715, %v732
        %v737 = vmul.f32 %v717, %v733
        %v739 = vsel %vm584, %v734, 0
        %741 = vmatpush.msra.mxu0 0.0
        %742 = vmatpush.msra.mxu0 0.0
        %743 = vmatpush.msra.mxu0 0.0
        %744 = vmatpush.msra.mxu0 0.0
        %745 = vmatpush.msra.mxu0 0.0
        %746 = vmatpush.msra.mxu0 0.0
        %747 = vmatpush.msra.mxu0 0.0
        %748 = vmatpush.msra.mxu0 0.0
        %749 = vmatpush.msra.mxu0 0.0
        %750 = vmatpush.msra.mxu0 0.0
        %751 = vmatpush.msra.mxu0 0.0
        %752 = vmatpush.msra.mxu0 0.0
        %753 = vmatpush.msra.mxu0 0.0
        %754 = vmatpush.msra.mxu0 0.0
        %755 = vmatpush.msra.mxu0 0.0
        %756 = vmatpush.msra.mxu0 %v566
        %757 = vmatmul.f32.gmra.mxu0 %v739
        %v758 = vpop.f32.mrf.mxu0
        %v759 = vadd.f32 0.0, %v758
        %760 = vdwg.mxu0
        %v762 = vsel %vm584, %v735, 0
        %764 = vmatpush.msra.mxu0 0.0
        %765 = vmatpush.msra.mxu0 0.0
        %766 = vmatpush.msra.mxu0 0.0
        %767 = vmatpush.msra.mxu0 0.0
        %768 = vmatpush.msra.mxu0 0.0
        %769 = vmatpush.msra.mxu0 0.0
        %770 = vmatpush.msra.mxu0 0.0
        %771 = vmatpush.msra.mxu0 0.0
        %772 = vmatpush.msra.mxu0 0.0
        %773 = vmatpush.msra.mxu0 0.0
        %774 = vmatpush.msra.mxu0 0.0
        %775 = vmatpush.msra.mxu0 0.0
        %776 = vmatpush.msra.mxu0 0.0
        %777 = vmatpush.msra.mxu0 0.0
        %778 = vmatpush.msra.mxu0 0.0
        %779 = vmatpush.msra.mxu0 %v569
        %780 = vmatmul.f32.gmra.mxu0 %v762
        %v781 = vpop.f32.mrf.mxu0
        %v782 = vadd.f32 0.0, %v781
        %783 = vdwg.mxu0
        %v785 = vsel %vm584, %v736, 0
        %787 = vmatpush.msra.mxu0 0.0
        %788 = vmatpush.msra.mxu0 0.0
        %789 = vmatpush.msra.mxu0 0.0
        %790 = vmatpush.msra.mxu0 0.0
        %791 = vmatpush.msra.mxu0 0.0
        %792 = vmatpush.msra.mxu0 0.0
        %793 = vmatpush.msra.mxu0 0.0
        %794 = vmatpush.msra.mxu0 0.0
        %795 = vmatpush.msra.mxu0 0.0
        %796 = vmatpush.msra.mxu0 0.0
        %797 = vmatpush.msra.mxu0 0.0
        %798 = vmatpush.msra.mxu0 0.0
        %799 = vmatpush.msra.mxu0 0.0
        %800 = vmatpush.msra.mxu0 0.0
        %801 = vmatpush.msra.mxu0 0.0
        %802 = vmatpush.msra.mxu0 %v572
        %803 = vmatmul.f32.gmra.mxu0 %v785
        %v804 = vpop.f32.mrf.mxu0
        %v805 = vadd.f32 0.0, %v804
        %806 = vdwg.mxu0
        %v808 = vsel %vm584, %v737, 0
        %810 = vmatpush.msra.mxu0 0.0
        %811 = vmatpush.msra.mxu0 0.0
        %812 = vmatpush.msra.mxu0 0.0
        %813 = vmatpush.msra.mxu0 0.0
        %814 = vmatpush.msra.mxu0 0.0
        %815 = vmatpush.msra.mxu0 0.0
        %816 = vmatpush.msra.mxu0 0.0
        %817 = vmatpush.msra.mxu0 0.0
        %818 = vmatpush.msra.mxu0 0.0
        %819 = vmatpush.msra.mxu0 0.0
        %820 = vmatpush.msra.mxu0 0.0
        %821 = vmatpush.msra.mxu0 0.0
        %822 = vmatpush.msra.mxu0 0.0
        %823 = vmatpush.msra.mxu0 0.0
        %824 = vmatpush.msra.mxu0 0.0
        %825 = vmatpush.msra.mxu0 %v575
        %826 = vmatmul.f32.gmra.mxu0 %v808
        %v827 = vpop.f32.mrf.mxu0
        %v828 = vadd.f32 0.0, %v827
        %829 = vdwg.mxu0
        %830 = vrot.lane.b32.xlu0 %v577, 120
        %v831 = vpop.permute.xlu0 %830
        %832 = vrot.lane.b32.xlu0 %v520, 88
        %v833 = vpop.permute.xlu0 %832
        %v834 = vsel %vm584, %v831, 0
        %v836 = vsel %vm584, %v833, 0
        %838 = vmatpush.xpose.msra.mxu0 0.0
        %839 = vmatpush.xpose.msra.mxu0 0.0
        %840 = vmatpush.xpose.msra.mxu0 0.0
        %841 = vmatpush.xpose.msra.mxu0 0.0
        %842 = vmatpush.xpose.msra.mxu0 0.0
        %843 = vmatpush.xpose.msra.mxu0 0.0
        %844 = vmatpush.xpose.msra.mxu0 0.0
        %845 = vmatpush.xpose.msra.mxu0 0.0
        %846 = vmatpush.xpose.msra.mxu0 0.0
        %847 = vmatpush.xpose.msra.mxu0 0.0
        %848 = vmatpush.xpose.msra.mxu0 0.0
        %849 = vmatpush.xpose.msra.mxu0 0.0
        %850 = vmatpush.xpose.msra.mxu0 0.0
        %851 = vmatpush.xpose.msra.mxu0 0.0
        %852 = vmatpush.xpose.msra.mxu0 0.0
        %853 = vmatpush.xpose.msra.mxu0 %v836
        %854 = vmatmul.f32.gmra.mxu0 %v834
        %v855 = vpop.f32.mrf.mxu0
        %v856 = vadd.f32 0.0, %v855
        %857 = vdwg.mxu0
        %858 = vrot.lane.b32.xlu0 %v578, 120
        %v859 = vpop.permute.xlu0 %858
        %860 = vrot.lane.b32.xlu0 %v523, 88
        %v861 = vpop.permute.xlu0 %860
        %v862 = vsel %vm584, %v859, 0
        %v864 = vsel %vm584, %v861, 0
        %866 = vmatpush.xpose.msra.mxu0 0.0
        %867 = vmatpush.xpose.msra.mxu0 0.0
        %868 = vmatpush.xpose.msra.mxu0 0.0
        %869 = vmatpush.xpose.msra.mxu0 0.0
        %870 = vmatpush.xpose.msra.mxu0 0.0
        %871 = vmatpush.xpose.msra.mxu0 0.0
        %872 = vmatpush.xpose.msra.mxu0 0.0
        %873 = vmatpush.xpose.msra.mxu0 0.0
        %874 = vmatpush.xpose.msra.mxu0 0.0
        %875 = vmatpush.xpose.msra.mxu0 0.0
        %876 = vmatpush.xpose.msra.mxu0 0.0
        %877 = vmatpush.xpose.msra.mxu0 0.0
        %878 = vmatpush.xpose.msra.mxu0 0.0
        %879 = vmatpush.xpose.msra.mxu0 0.0
        %880 = vmatpush.xpose.msra.mxu0 0.0
        %881 = vmatpush.xpose.msra.mxu0 %v864
        %882 = vmatmul.f32.gmra.mxu0 %v862
        %v883 = vpop.f32.mrf.mxu0
        %v884 = vadd.f32 0.0, %v883
        %885 = vdwg.mxu0
        %886 = vrot.lane.b32.xlu0 %v579, 120
        %v887 = vpop.permute.xlu0 %886
        %888 = vrot.lane.b32.xlu0 %v526, 88
        %v889 = vpop.permute.xlu0 %888
        %v890 = vsel %vm584, %v887, 0
        %v892 = vsel %vm584, %v889, 0
        %894 = vmatpush.xpose.msra.mxu0 0.0
        %895 = vmatpush.xpose.msra.mxu0 0.0
        %896 = vmatpush.xpose.msra.mxu0 0.0
        %897 = vmatpush.xpose.msra.mxu0 0.0
        %898 = vmatpush.xpose.msra.mxu0 0.0
        %899 = vmatpush.xpose.msra.mxu0 0.0
        %900 = vmatpush.xpose.msra.mxu0 0.0
        %901 = vmatpush.xpose.msra.mxu0 0.0
        %902 = vmatpush.xpose.msra.mxu0 0.0
        %903 = vmatpush.xpose.msra.mxu0 0.0
        %904 = vmatpush.xpose.msra.mxu0 0.0
        %905 = vmatpush.xpose.msra.mxu0 0.0
        %906 = vmatpush.xpose.msra.mxu0 0.0
        %907 = vmatpush.xpose.msra.mxu0 0.0
        %908 = vmatpush.xpose.msra.mxu0 0.0
        %909 = vmatpush.xpose.msra.mxu0 %v892
        %910 = vmatmul.f32.gmra.mxu0 %v890
        %v911 = vpop.f32.mrf.mxu0
        %v912 = vadd.f32 0.0, %v911
        %913 = vdwg.mxu0
        %914 = vrot.lane.b32.xlu0 %v580, 120
        %v915 = vpop.permute.xlu0 %914
        %916 = vrot.lane.b32.xlu0 %v529, 88
        %v917 = vpop.permute.xlu0 %916
        %v918 = vsel %vm584, %v915, 0
        %v920 = vsel %vm584, %v917, 0
        %922 = vmatpush.xpose.msra.mxu0 0.0
        %923 = vmatpush.xpose.msra.mxu0 0.0
        %924 = vmatpush.xpose.msra.mxu0 0.0
        %925 = vmatpush.xpose.msra.mxu0 0.0
        %926 = vmatpush.xpose.msra.mxu0 0.0
        %927 = vmatpush.xpose.msra.mxu0 0.0
        %928 = vmatpush.xpose.msra.mxu0 0.0
        %929 = vmatpush.xpose.msra.mxu0 0.0
        %930 = vmatpush.xpose.msra.mxu0 0.0
        %931 = vmatpush.xpose.msra.mxu0 0.0
        %932 = vmatpush.xpose.msra.mxu0 0.0
        %933 = vmatpush.xpose.msra.mxu0 0.0
        %934 = vmatpush.xpose.msra.mxu0 0.0
        %935 = vmatpush.xpose.msra.mxu0 0.0
        %936 = vmatpush.xpose.msra.mxu0 0.0
        %937 = vmatpush.xpose.msra.mxu0 %v920
        %938 = vmatmul.f32.gmra.mxu0 %v918
        %v939 = vpop.f32.mrf.mxu0
        %v940 = vadd.f32 0.0, %v939
        %941 = vdwg.mxu0
        %v942 = vsel %vm584, %v856, -inf
        %943 = vmax.xlane.f32.xlu0 %v942
        %v944 = vpop.xlane.xlu0 %943
        %v945 = vsel %vm584, %v884, -inf
        %946 = vmax.xlane.f32.xlu0 %v945
        %v947 = vpop.xlane.xlu0 %946
        %v948 = vsel %vm584, %v912, -inf
        %949 = vmax.xlane.f32.xlu0 %v948
        %v950 = vpop.xlane.xlu0 %949
        %v951 = vsel %vm584, %v940, -inf
        %952 = vmax.xlane.f32.xlu0 %v951
        %v953 = vpop.xlane.xlu0 %952
        %v954 = vsub.f32 %v856, %v944
        %v955 = vsub.f32 %v884, %v947
        %v956 = vsub.f32 %v912, %v950
        %v957 = vsub.f32 %v940, %v953
        %v958 = vmul.f32 %v954, 1.442695
        %v959 = vpow.pop %v958
        %v960 = vmul.f32 %v955, 1.442695
        %v961 = vpow.pop %v960
        %v962 = vmul.f32 %v956, 1.442695
        %v963 = vpow.pop %v962
        %v964 = vmul.f32 %v957, 1.442695
        %v965 = vpow.pop %v964
        %v966 = vsel %vm584, %v959, 0.0
        %967 = vadd.xlane.f32.xlu0 %v966
        %v968 = vpop.xlane.xlu0 %967
        %v969 = vsel %vm584, %v961, 0.0
        %970 = vadd.xlane.f32.xlu0 %v969
        %v971 = vpop.xlane.xlu0 %970
        %v972 = vsel %vm584, %v963, 0.0
        %973 = vadd.xlane.f32.xlu0 %v972
        %v974 = vpop.xlane.xlu0 %973
        %v975 = vsel %vm584, %v965, 0.0
        %976 = vadd.xlane.f32.xlu0 %v975
        %v977 = vpop.xlane.xlu0 %976
        %v978 = vrcp.pop %v968
        %v979 = vrcp.pop %v971
        %v980 = vrcp.pop %v974
        %v981 = vrcp.pop %v977
        %v982 = vmul.f32 %v959, %v978
        %v983 = vmul.f32 %v961, %v979
        %v984 = vmul.f32 %v963, %v980
        %v985 = vmul.f32 %v965, %v981
        %987 = vrot.lane.b32.xlu0 %v566, 120
        %v988 = vpop.permute.xlu0 %987
        %v991 = vsel %vm584, %v982, 0
        %993 = vmatpush.msra.mxu0 0.0
        %994 = vmatpush.msra.mxu0 0.0
        %995 = vmatpush.msra.mxu0 0.0
        %996 = vmatpush.msra.mxu0 0.0
        %997 = vmatpush.msra.mxu0 0.0
        %998 = vmatpush.msra.mxu0 0.0
        %999 = vmatpush.msra.mxu0 0.0
        %1000 = vmatpush.msra.mxu0 0.0
        %1001 = vmatpush.msra.mxu0 0.0
        %1002 = vmatpush.msra.mxu0 0.0
        %1003 = vmatpush.msra.mxu0 0.0
        %1004 = vmatpush.msra.mxu0 0.0
        %1005 = vmatpush.msra.mxu0 0.0
        %1006 = vmatpush.msra.mxu0 0.0
        %1007 = vmatpush.msra.mxu0 0.0
        %1008 = vmatpush.msra.mxu0 %v988
        %1009 = vmatmul.f32.gmra.mxu0 %v991
        %v1010 = vpop.f32.mrf.mxu0
        %v1011 = vadd.f32 0.0, %v1010
        %1012 = vdwg.mxu0
        %1014 = vrot.lane.b32.xlu0 %v569, 120
        %v1015 = vpop.permute.xlu0 %1014
        %v1018 = vsel %vm584, %v983, 0
        %1020 = vmatpush.msra.mxu0 0.0
        %1021 = vmatpush.msra.mxu0 0.0
        %1022 = vmatpush.msra.mxu0 0.0
        %1023 = vmatpush.msra.mxu0 0.0
        %1024 = vmatpush.msra.mxu0 0.0
        %1025 = vmatpush.msra.mxu0 0.0
        %1026 = vmatpush.msra.mxu0 0.0
        %1027 = vmatpush.msra.mxu0 0.0
        %1028 = vmatpush.msra.mxu0 0.0
        %1029 = vmatpush.msra.mxu0 0.0
        %1030 = vmatpush.msra.mxu0 0.0
        %1031 = vmatpush.msra.mxu0 0.0
        %1032 = vmatpush.msra.mxu0 0.0
        %1033 = vmatpush.msra.mxu0 0.0
        %1034 = vmatpush.msra.mxu0 0.0
        %1035 = vmatpush.msra.mxu0 %v1015
        %1036 = vmatmul.f32.gmra.mxu0 %v1018
        %v1037 = vpop.f32.mrf.mxu0
        %v1038 = vadd.f32 0.0, %v1037
        %1039 = vdwg.mxu0
        %1041 = vrot.lane.b32.xlu0 %v572, 120
        %v1042 = vpop.permute.xlu0 %1041
        %v1045 = vsel %vm584, %v984, 0
        %1047 = vmatpush.msra.mxu0 0.0
        %1048 = vmatpush.msra.mxu0 0.0
        %1049 = vmatpush.msra.mxu0 0.0
        %1050 = vmatpush.msra.mxu0 0.0
        %1051 = vmatpush.msra.mxu0 0.0
        %1052 = vmatpush.msra.mxu0 0.0
        %1053 = vmatpush.msra.mxu0 0.0
        %1054 = vmatpush.msra.mxu0 0.0
        %1055 = vmatpush.msra.mxu0 0.0
        %1056 = vmatpush.msra.mxu0 0.0
        %1057 = vmatpush.msra.mxu0 0.0
        %1058 = vmatpush.msra.mxu0 0.0
        %1059 = vmatpush.msra.mxu0 0.0
        %1060 = vmatpush.msra.mxu0 0.0
        %1061 = vmatpush.msra.mxu0 0.0
        %1062 = vmatpush.msra.mxu0 %v1042
        %1063 = vmatmul.f32.gmra.mxu0 %v1045
        %v1064 = vpop.f32.mrf.mxu0
        %v1065 = vadd.f32 0.0, %v1064
        %1066 = vdwg.mxu0
        %1068 = vrot.lane.b32.xlu0 %v575, 120
        %v1069 = vpop.permute.xlu0 %1068
        %v1072 = vsel %vm584, %v985, 0
        %1074 = vmatpush.msra.mxu0 0.0
        %1075 = vmatpush.msra.mxu0 0.0
        %1076 = vmatpush.msra.mxu0 0.0
        %1077 = vmatpush.msra.mxu0 0.0
        %1078 = vmatpush.msra.mxu0 0.0
        %1079 = vmatpush.msra.mxu0 0.0
        %1080 = vmatpush.msra.mxu0 0.0
        %1081 = vmatpush.msra.mxu0 0.0
        %1082 = vmatpush.msra.mxu0 0.0
        %1083 = vmatpush.msra.mxu0 0.0
        %1084 = vmatpush.msra.mxu0 0.0
        %1085 = vmatpush.msra.mxu0 0.0
        %1086 = vmatpush.msra.mxu0 0.0
        %1087 = vmatpush.msra.mxu0 0.0
        %1088 = vmatpush.msra.mxu0 0.0
        %1089 = vmatpush.msra.mxu0 %v1069
        %1090 = vmatmul.f32.gmra.mxu0 %v1072
        %v1091 = vpop.f32.mrf.mxu0
        %v1092 = vadd.f32 0.0, %v1091
        %1093 = vdwg.mxu0
        %1094 = vrot.lane.b32.xlu0 %v577, 112
        %v1095 = vpop.permute.xlu0 %1094
        %1096 = vrot.lane.b32.xlu0 %v520, 80
        %v1097 = vpop.permute.xlu0 %1096
        %v1098 = vsel %vm584, %v1095, 0
        %v1100 = vsel %vm584, %v1097, 0
        %1102 = vmatpush.xpose.msra.mxu0 0.0
        %1103 = vmatpush.xpose.msra.mxu0 0.0
        %1104 = vmatpush.xpose.msra.mxu0 0.0
        %1105 = vmatpush.xpose.msra.mxu0 0.0
        %1106 = vmatpush.xpose.msra.mxu0 0.0
        %1107 = vmatpush.xpose.msra.mxu0 0.0
        %1108 = vmatpush.xpose.msra.mxu0 0.0
        %1109 = vmatpush.xpose.msra.mxu0 0.0
        %1110 = vmatpush.xpose.msra.mxu0 0.0
        %1111 = vmatpush.xpose.msra.mxu0 0.0
        %1112 = vmatpush.xpose.msra.mxu0 0.0
        %1113 = vmatpush.xpose.msra.mxu0 0.0
        %1114 = vmatpush.xpose.msra.mxu0 0.0
        %1115 = vmatpush.xpose.msra.mxu0 0.0
        %1116 = vmatpush.xpose.msra.mxu0 0.0
        %1117 = vmatpush.xpose.msra.mxu0 %v1100
        %1118 = vmatmul.f32.gmra.mxu0 %v1098
        %v1119 = vpop.f32.mrf.mxu0
        %v1120 = vadd.f32 0.0, %v1119
        %1121 = vdwg.mxu0
        %1122 = vrot.lane.b32.xlu0 %v578, 112
        %v1123 = vpop.permute.xlu0 %1122
        %1124 = vrot.lane.b32.xlu0 %v523, 80
        %v1125 = vpop.permute.xlu0 %1124
        %v1126 = vsel %vm584, %v1123, 0
        %v1128 = vsel %vm584, %v1125, 0
        %1130 = vmatpush.xpose.msra.mxu0 0.0
        %1131 = vmatpush.xpose.msra.mxu0 0.0
        %1132 = vmatpush.xpose.msra.mxu0 0.0
        %1133 = vmatpush.xpose.msra.mxu0 0.0
        %1134 = vmatpush.xpose.msra.mxu0 0.0
        %1135 = vmatpush.xpose.msra.mxu0 0.0
        %1136 = vmatpush.xpose.msra.mxu0 0.0
        %1137 = vmatpush.xpose.msra.mxu0 0.0
        %1138 = vmatpush.xpose.msra.mxu0 0.0
        %1139 = vmatpush.xpose.msra.mxu0 0.0
        %1140 = vmatpush.xpose.msra.mxu0 0.0
        %1141 = vmatpush.xpose.msra.mxu0 0.0
        %1142 = vmatpush.xpose.msra.mxu0 0.0
        %1143 = vmatpush.xpose.msra.mxu0 0.0
        %1144 = vmatpush.xpose.msra.mxu0 0.0
        %1145 = vmatpush.xpose.msra.mxu0 %v1128
        %1146 = vmatmul.f32.gmra.mxu0 %v1126
        %v1147 = vpop.f32.mrf.mxu0
        %v1148 = vadd.f32 0.0, %v1147
        %1149 = vdwg.mxu0
        %1150 = vrot.lane.b32.xlu0 %v579, 112
        %v1151 = vpop.permute.xlu0 %1150
        %1152 = vrot.lane.b32.xlu0 %v526, 80
        %v1153 = vpop.permute.xlu0 %1152
        %v1154 = vsel %vm584, %v1151, 0
        %v1156 = vsel %vm584, %v1153, 0
        %1158 = vmatpush.xpose.msra.mxu0 0.0
        %1159 = vmatpush.xpose.msra.mxu0 0.0
        %1160 = vmatpush.xpose.msra.mxu0 0.0
        %1161 = vmatpush.xpose.msra.mxu0 0.0
        %1162 = vmatpush.xpose.msra.mxu0 0.0
        %1163 = vmatpush.xpose.msra.mxu0 0.0
        %1164 = vmatpush.xpose.msra.mxu0 0.0
        %1165 = vmatpush.xpose.msra.mxu0 0.0
        %1166 = vmatpush.xpose.msra.mxu0 0.0
        %1167 = vmatpush.xpose.msra.mxu0 0.0
        %1168 = vmatpush.xpose.msra.mxu0 0.0
        %1169 = vmatpush.xpose.msra.mxu0 0.0
        %1170 = vmatpush.xpose.msra.mxu0 0.0
        %1171 = vmatpush.xpose.msra.mxu0 0.0
        %1172 = vmatpush.xpose.msra.mxu0 0.0
        %1173 = vmatpush.xpose.msra.mxu0 %v1156
        %1174 = vmatmul.f32.gmra.mxu0 %v1154
        %v1175 = vpop.f32.mrf.mxu0
        %v1176 = vadd.f32 0.0, %v1175
        %1177 = vdwg.mxu0
        %1178 = vrot.lane.b32.xlu0 %v580, 112
        %v1179 = vpop.permute.xlu0 %1178
        %1180 = vrot.lane.b32.xlu0 %v529, 80
        %v1181 = vpop.permute.xlu0 %1180
        %v1182 = vsel %vm584, %v1179, 0
        %v1184 = vsel %vm584, %v1181, 0
        %1186 = vmatpush.xpose.msra.mxu0 0.0
        %1187 = vmatpush.xpose.msra.mxu0 0.0
        %1188 = vmatpush.xpose.msra.mxu0 0.0
        %1189 = vmatpush.xpose.msra.mxu0 0.0
        %1190 = vmatpush.xpose.msra.mxu0 0.0
        %1191 = vmatpush.xpose.msra.mxu0 0.0
        %1192 = vmatpush.xpose.msra.mxu0 0.0
        %1193 = vmatpush.xpose.msra.mxu0 0.0
        %1194 = vmatpush.xpose.msra.mxu0 0.0
        %1195 = vmatpush.xpose.msra.mxu0 0.0
        %1196 = vmatpush.xpose.msra.mxu0 0.0
        %1197 = vmatpush.xpose.msra.mxu0 0.0
        %1198 = vmatpush.xpose.msra.mxu0 0.0
        %1199 = vmatpush.xpose.msra.mxu0 0.0
        %1200 = vmatpush.xpose.msra.mxu0 0.0
        %1201 = vmatpush.xpose.msra.mxu0 %v1184
        %1202 = vmatmul.f32.gmra.mxu0 %v1182
        %v1203 = vpop.f32.mrf.mxu0
        %v1204 = vadd.f32 0.0, %v1203
        %1205 = vdwg.mxu0
        %v1206 = vsel %vm584, %v1120, -inf
        %1207 = vmax.xlane.f32.xlu0 %v1206
        %v1208 = vpop.xlane.xlu0 %1207
        %v1209 = vsel %vm584, %v1148, -inf
        %1210 = vmax.xlane.f32.xlu0 %v1209
        %v1211 = vpop.xlane.xlu0 %1210
        %v1212 = vsel %vm584, %v1176, -inf
        %1213 = vmax.xlane.f32.xlu0 %v1212
        %v1214 = vpop.xlane.xlu0 %1213
        %v1215 = vsel %vm584, %v1204, -inf
        %1216 = vmax.xlane.f32.xlu0 %v1215
        %v1217 = vpop.xlane.xlu0 %1216
        %v1218 = vsub.f32 %v1120, %v1208
        %v1219 = vsub.f32 %v1148, %v1211
        %v1220 = vsub.f32 %v1176, %v1214
        %v1221 = vsub.f32 %v1204, %v1217
        %v1222 = vmul.f32 %v1218, 1.442695
        %v1223 = vpow.pop %v1222
        %v1224 = vmul.f32 %v1219, 1.442695
        %v1225 = vpow.pop %v1224
        %v1226 = vmul.f32 %v1220, 1.442695
        %v1227 = vpow.pop %v1226
        %v1228 = vmul.f32 %v1221, 1.442695
        %v1229 = vpow.pop %v1228
        %v1230 = vsel %vm584, %v1223, 0.0
        %1231 = vadd.xlane.f32.xlu0 %v1230
        %v1232 = vpop.xlane.xlu0 %1231
        %v1233 = vsel %vm584, %v1225, 0.0
        %1234 = vadd.xlane.f32.xlu0 %v1233
        %v1235 = vpop.xlane.xlu0 %1234
        %v1236 = vsel %vm584, %v1227, 0.0
        %1237 = vadd.xlane.f32.xlu0 %v1236
        %v1238 = vpop.xlane.xlu0 %1237
        %v1239 = vsel %vm584, %v1229, 0.0
        %1240 = vadd.xlane.f32.xlu0 %v1239
        %v1241 = vpop.xlane.xlu0 %1240
        %v1242 = vrcp.pop %v1232
        %v1243 = vrcp.pop %v1235
        %v1244 = vrcp.pop %v1238
        %v1245 = vrcp.pop %v1241
        %v1246 = vmul.f32 %v1223, %v1242
        %v1247 = vmul.f32 %v1225, %v1243
        %v1248 = vmul.f32 %v1227, %v1244
        %v1249 = vmul.f32 %v1229, %v1245
        %1250 = vrot.lane.b32.xlu0 %v566, 112
        %v1251 = vpop.permute.xlu0 %1250
        %v1254 = vsel %vm584, %v1246, 0
        %1256 = vmatpush.msra.mxu0 0.0
        %1257 = vmatpush.msra.mxu0 0.0
        %1258 = vmatpush.msra.mxu0 0.0
        %1259 = vmatpush.msra.mxu0 0.0
        %1260 = vmatpush.msra.mxu0 0.0
        %1261 = vmatpush.msra.mxu0 0.0
        %1262 = vmatpush.msra.mxu0 0.0
        %1263 = vmatpush.msra.mxu0 0.0
        %1264 = vmatpush.msra.mxu0 0.0
        %1265 = vmatpush.msra.mxu0 0.0
        %1266 = vmatpush.msra.mxu0 0.0
        %1267 = vmatpush.msra.mxu0 0.0
        %1268 = vmatpush.msra.mxu0 0.0
        %1269 = vmatpush.msra.mxu0 0.0
        %1270 = vmatpush.msra.mxu0 0.0
        %1271 = vmatpush.msra.mxu0 %v1251
        %1272 = vmatmul.f32.gmra.mxu0 %v1254
        %v1273 = vpop.f32.mrf.mxu0
        %v1274 = vadd.f32 0.0, %v1273
        %1275 = vdwg.mxu0
        %1276 = vrot.lane.b32.xlu0 %v569, 112
        %v1277 = vpop.permute.xlu0 %1276
        %v1280 = vsel %vm584, %v1247, 0
        %1282 = vmatpush.msra.mxu0 0.0
        %1283 = vmatpush.msra.mxu0 0.0
        %1284 = vmatpush.msra.mxu0 0.0
        %1285 = vmatpush.msra.mxu0 0.0
        %1286 = vmatpush.msra.mxu0 0.0
        %1287 = vmatpush.msra.mxu0 0.0
        %1288 = vmatpush.msra.mxu0 0.0
        %1289 = vmatpush.msra.mxu0 0.0
        %1290 = vmatpush.msra.mxu0 0.0
        %1291 = vmatpush.msra.mxu0 0.0
        %1292 = vmatpush.msra.mxu0 0.0
        %1293 = vmatpush.msra.mxu0 0.0
        %1294 = vmatpush.msra.mxu0 0.0
        %1295 = vmatpush.msra.mxu0 0.0
        %1296 = vmatpush.msra.mxu0 0.0
        %1297 = vmatpush.msra.mxu0 %v1277
        %1298 = vmatmul.f32.gmra.mxu0 %v1280
        %v1299 = vpop.f32.mrf.mxu0
        %v1300 = vadd.f32 0.0, %v1299
        %1301 = vdwg.mxu0
        %1302 = vrot.lane.b32.xlu0 %v572, 112
        %v1303 = vpop.permute.xlu0 %1302
        %v1306 = vsel %vm584, %v1248, 0
        %1308 = vmatpush.msra.mxu0 0.0
        %1309 = vmatpush.msra.mxu0 0.0
        %1310 = vmatpush.msra.mxu0 0.0
        %1311 = vmatpush.msra.mxu0 0.0
        %1312 = vmatpush.msra.mxu0 0.0
        %1313 = vmatpush.msra.mxu0 0.0
        %1314 = vmatpush.msra.mxu0 0.0
        %1315 = vmatpush.msra.mxu0 0.0
        %1316 = vmatpush.msra.mxu0 0.0
        %1317 = vmatpush.msra.mxu0 0.0
        %1318 = vmatpush.msra.mxu0 0.0
        %1319 = vmatpush.msra.mxu0 0.0
        %1320 = vmatpush.msra.mxu0 0.0
        %1321 = vmatpush.msra.mxu0 0.0
        %1322 = vmatpush.msra.mxu0 0.0
        %1323 = vmatpush.msra.mxu0 %v1303
        %1324 = vmatmul.f32.gmra.mxu0 %v1306
        %v1325 = vpop.f32.mrf.mxu0
        %v1326 = vadd.f32 0.0, %v1325
        %1327 = vdwg.mxu0
        %1328 = vrot.lane.b32.xlu0 %v575, 112
        %v1329 = vpop.permute.xlu0 %1328
        %v1332 = vsel %vm584, %v1249, 0
        %1334 = vmatpush.msra.mxu0 0.0
        %1335 = vmatpush.msra.mxu0 0.0
        %1336 = vmatpush.msra.mxu0 0.0
        %1337 = vmatpush.msra.mxu0 0.0
        %1338 = vmatpush.msra.mxu0 0.0
        %1339 = vmatpush.msra.mxu0 0.0
        %1340 = vmatpush.msra.mxu0 0.0
        %1341 = vmatpush.msra.mxu0 0.0
        %1342 = vmatpush.msra.mxu0 0.0
        %1343 = vmatpush.msra.mxu0 0.0
        %1344 = vmatpush.msra.mxu0 0.0
        %1345 = vmatpush.msra.mxu0 0.0
        %1346 = vmatpush.msra.mxu0 0.0
        %1347 = vmatpush.msra.mxu0 0.0
        %1348 = vmatpush.msra.mxu0 0.0
        %1349 = vmatpush.msra.mxu0 %v1329
        %1350 = vmatmul.f32.gmra.mxu0 %v1332
        %v1351 = vpop.f32.mrf.mxu0
        %v1352 = vadd.f32 0.0, %v1351
        %1353 = vdwg.mxu0
        %1354 = vrot.lane.b32.xlu0 %v577, 104
        %v1355 = vpop.permute.xlu0 %1354
        %1356 = vrot.lane.b32.xlu0 %v520, 72
        %v1357 = vpop.permute.xlu0 %1356
        %v1358 = vsel %vm584, %v1355, 0
        %v1360 = vsel %vm584, %v1357, 0
        %1362 = vmatpush.xpose.msra.mxu0 0.0
        %1363 = vmatpush.xpose.msra.mxu0 0.0
        %1364 = vmatpush.xpose.msra.mxu0 0.0
        %1365 = vmatpush.xpose.msra.mxu0 0.0
        %1366 = vmatpush.xpose.msra.mxu0 0.0
        %1367 = vmatpush.xpose.msra.mxu0 0.0
        %1368 = vmatpush.xpose.msra.mxu0 0.0
        %1369 = vmatpush.xpose.msra.mxu0 0.0
        %1370 = vmatpush.xpose.msra.mxu0 0.0
        %1371 = vmatpush.xpose.msra.mxu0 0.0
        %1372 = vmatpush.xpose.msra.mxu0 0.0
        %1373 = vmatpush.xpose.msra.mxu0 0.0
        %1374 = vmatpush.xpose.msra.mxu0 0.0
        %1375 = vmatpush.xpose.msra.mxu0 0.0
        %1376 = vmatpush.xpose.msra.mxu0 0.0
        %1377 = vmatpush.xpose.msra.mxu0 %v1360
        %1378 = vmatmul.f32.gmra.mxu0 %v1358
        %v1379 = vpop.f32.mrf.mxu0
        %v1380 = vadd.f32 0.0, %v1379
        %1381 = vdwg.mxu0
        %1382 = vrot.lane.b32.xlu0 %v578, 104
        %v1383 = vpop.permute.xlu0 %1382
        %1384 = vrot.lane.b32.xlu0 %v523, 72
        %v1385 = vpop.permute.xlu0 %1384
        %v1386 = vsel %vm584, %v1383, 0
        %v1388 = vsel %vm584, %v1385, 0
        %1390 = vmatpush.xpose.msra.mxu0 0.0
        %1391 = vmatpush.xpose.msra.mxu0 0.0
        %1392 = vmatpush.xpose.msra.mxu0 0.0
        %1393 = vmatpush.xpose.msra.mxu0 0.0
        %1394 = vmatpush.xpose.msra.mxu0 0.0
        %1395 = vmatpush.xpose.msra.mxu0 0.0
        %1396 = vmatpush.xpose.msra.mxu0 0.0
        %1397 = vmatpush.xpose.msra.mxu0 0.0
        %1398 = vmatpush.xpose.msra.mxu0 0.0
        %1399 = vmatpush.xpose.msra.mxu0 0.0
        %1400 = vmatpush.xpose.msra.mxu0 0.0
        %1401 = vmatpush.xpose.msra.mxu0 0.0
        %1402 = vmatpush.xpose.msra.mxu0 0.0
        %1403 = vmatpush.xpose.msra.mxu0 0.0
        %1404 = vmatpush.xpose.msra.mxu0 0.0
        %1405 = vmatpush.xpose.msra.mxu0 %v1388
        %1406 = vmatmul.f32.gmra.mxu0 %v1386
        %v1407 = vpop.f32.mrf.mxu0
        %v1408 = vadd.f32 0.0, %v1407
        %1409 = vdwg.mxu0
        %1410 = vrot.lane.b32.xlu0 %v579, 104
        %v1411 = vpop.permute.xlu0 %1410
        %1412 = vrot.lane.b32.xlu0 %v526, 72
        %v1413 = vpop.permute.xlu0 %1412
        %v1414 = vsel %vm584, %v1411, 0
        %v1416 = vsel %vm584, %v1413, 0
        %1418 = vmatpush.xpose.msra.mxu0 0.0
        %1419 = vmatpush.xpose.msra.mxu0 0.0
        %1420 = vmatpush.xpose.msra.mxu0 0.0
        %1421 = vmatpush.xpose.msra.mxu0 0.0
        %1422 = vmatpush.xpose.msra.mxu0 0.0
        %1423 = vmatpush.xpose.msra.mxu0 0.0
        %1424 = vmatpush.xpose.msra.mxu0 0.0
        %1425 = vmatpush.xpose.msra.mxu0 0.0
        %1426 = vmatpush.xpose.msra.mxu0 0.0
        %1427 = vmatpush.xpose.msra.mxu0 0.0
        %1428 = vmatpush.xpose.msra.mxu0 0.0
        %1429 = vmatpush.xpose.msra.mxu0 0.0
        %1430 = vmatpush.xpose.msra.mxu0 0.0
        %1431 = vmatpush.xpose.msra.mxu0 0.0
        %1432 = vmatpush.xpose.msra.mxu0 0.0
        %1433 = vmatpush.xpose.msra.mxu0 %v1416
        %1434 = vmatmul.f32.gmra.mxu0 %v1414
        %v1435 = vpop.f32.mrf.mxu0
        %v1436 = vadd.f32 0.0, %v1435
        %1437 = vdwg.mxu0
        %1438 = vrot.lane.b32.xlu0 %v580, 104
        %v1439 = vpop.permute.xlu0 %1438
        %1440 = vrot.lane.b32.xlu0 %v529, 72
        %v1441 = vpop.permute.xlu0 %1440
        %v1442 = vsel %vm584, %v1439, 0
        %v1444 = vsel %vm584, %v1441, 0
        %1446 = vmatpush.xpose.msra.mxu0 0.0
        %1447 = vmatpush.xpose.msra.mxu0 0.0
        %1448 = vmatpush.xpose.msra.mxu0 0.0
        %1449 = vmatpush.xpose.msra.mxu0 0.0
        %1450 = vmatpush.xpose.msra.mxu0 0.0
        %1451 = vmatpush.xpose.msra.mxu0 0.0
        %1452 = vmatpush.xpose.msra.mxu0 0.0
        %1453 = vmatpush.xpose.msra.mxu0 0.0
        %1454 = vmatpush.xpose.msra.mxu0 0.0
        %1455 = vmatpush.xpose.msra.mxu0 0.0
        %1456 = vmatpush.xpose.msra.mxu0 0.0
        %1457 = vmatpush.xpose.msra.mxu0 0.0
        %1458 = vmatpush.xpose.msra.mxu0 0.0
        %1459 = vmatpush.xpose.msra.mxu0 0.0
        %1460 = vmatpush.xpose.msra.mxu0 0.0
        %1461 = vmatpush.xpose.msra.mxu0 %v1444
        %1462 = vmatmul.f32.gmra.mxu0 %v1442
        %v1463 = vpop.f32.mrf.mxu0
        %v1464 = vadd.f32 0.0, %v1463
        %1465 = vdwg.mxu0
        %v1466 = vsel %vm584, %v1380, -inf
        %1467 = vmax.xlane.f32.xlu0 %v1466
        %v1468 = vpop.xlane.xlu0 %1467
        %v1469 = vsel %vm584, %v1408, -inf
        %1470 = vmax.xlane.f32.xlu0 %v1469
        %v1471 = vpop.xlane.xlu0 %1470
        %v1472 = vsel %vm584, %v1436, -inf
        %1473 = vmax.xlane.f32.xlu0 %v1472
        %v1474 = vpop.xlane.xlu0 %1473
        %v1475 = vsel %vm584, %v1464, -inf
        %1476 = vmax.xlane.f32.xlu0 %v1475
        %v1477 = vpop.xlane.xlu0 %1476
        %v1478 = vsub.f32 %v1380, %v1468
        %v1479 = vsub.f32 %v1408, %v1471
        %v1480 = vsub.f32 %v1436, %v1474
        %v1481 = vsub.f32 %v1464, %v1477
        %v1482 = vmul.f32 %v1478, 1.442695
        %v1483 = vpow.pop %v1482
        %v1484 = vmul.f32 %v1479, 1.442695
        %v1485 = vpow.pop %v1484
        %v1486 = vmul.f32 %v1480, 1.442695
        %v1487 = vpow.pop %v1486
        %v1488 = vmul.f32 %v1481, 1.442695
        %v1489 = vpow.pop %v1488
        %v1490 = vsel %vm584, %v1483, 0.0
        %1491 = vadd.xlane.f32.xlu0 %v1490
        %v1492 = vpop.xlane.xlu0 %1491
        %v1493 = vsel %vm584, %v1485, 0.0
        %1494 = vadd.xlane.f32.xlu0 %v1493
        %v1495 = vpop.xlane.xlu0 %1494
        %v1496 = vsel %vm584, %v1487, 0.0
        %1497 = vadd.xlane.f32.xlu0 %v1496
        %v1498 = vpop.xlane.xlu0 %1497
        %v1499 = vsel %vm584, %v1489, 0.0
        %1500 = vadd.xlane.f32.xlu0 %v1499
        %v1501 = vpop.xlane.xlu0 %1500
        %v1502 = vrcp.pop %v1492
        %v1503 = vrcp.pop %v1495
        %v1504 = vrcp.pop %v1498
        %v1505 = vrcp.pop %v1501
        %v1506 = vmul.f32 %v1483, %v1502
        %v1507 = vmul.f32 %v1485, %v1503
        %v1508 = vmul.f32 %v1487, %v1504
        %v1509 = vmul.f32 %v1489, %v1505
        %1510 = vrot.lane.b32.xlu0 %v566, 104
        %v1511 = vpop.permute.xlu0 %1510
        %v1514 = vsel %vm584, %v1506, 0
        %1516 = vmatpush.msra.mxu0 0.0
        %1517 = vmatpush.msra.mxu0 0.0
        %1518 = vmatpush.msra.mxu0 0.0
        %1519 = vmatpush.msra.mxu0 0.0
        %1520 = vmatpush.msra.mxu0 0.0
        %1521 = vmatpush.msra.mxu0 0.0
        %1522 = vmatpush.msra.mxu0 0.0
        %1523 = vmatpush.msra.mxu0 0.0
        %1524 = vmatpush.msra.mxu0 0.0
        %1525 = vmatpush.msra.mxu0 0.0
        %1526 = vmatpush.msra.mxu0 0.0
        %1527 = vmatpush.msra.mxu0 0.0
        %1528 = vmatpush.msra.mxu0 0.0
        %1529 = vmatpush.msra.mxu0 0.0
        %1530 = vmatpush.msra.mxu0 0.0
        %1531 = vmatpush.msra.mxu0 %v1511
        %1532 = vmatmul.f32.gmra.mxu0 %v1514
        %v1533 = vpop.f32.mrf.mxu0
        %v1534 = vadd.f32 0.0, %v1533
        %1535 = vdwg.mxu0
        %1536 = vrot.lane.b32.xlu0 %v569, 104
        %v1537 = vpop.permute.xlu0 %1536
        %v1540 = vsel %vm584, %v1507, 0
        %1542 = vmatpush.msra.mxu0 0.0
        %1543 = vmatpush.msra.mxu0 0.0
        %1544 = vmatpush.msra.mxu0 0.0
        %1545 = vmatpush.msra.mxu0 0.0
        %1546 = vmatpush.msra.mxu0 0.0
        %1547 = vmatpush.msra.mxu0 0.0
        %1548 = vmatpush.msra.mxu0 0.0
        %1549 = vmatpush.msra.mxu0 0.0
        %1550 = vmatpush.msra.mxu0 0.0
        %1551 = vmatpush.msra.mxu0 0.0
        %1552 = vmatpush.msra.mxu0 0.0
        %1553 = vmatpush.msra.mxu0 0.0
        %1554 = vmatpush.msra.mxu0 0.0
        %1555 = vmatpush.msra.mxu0 0.0
        %1556 = vmatpush.msra.mxu0 0.0
        %1557 = vmatpush.msra.mxu0 %v1537
        %1558 = vmatmul.f32.gmra.mxu0 %v1540
        %v1559 = vpop.f32.mrf.mxu0
        %v1560 = vadd.f32 0.0, %v1559
        %1561 = vdwg.mxu0
        %1562 = vrot.lane.b32.xlu0 %v572, 104
        %v1563 = vpop.permute.xlu0 %1562
        %v1566 = vsel %vm584, %v1508, 0
        %1568 = vmatpush.msra.mxu0 0.0
        %1569 = vmatpush.msra.mxu0 0.0
        %1570 = vmatpush.msra.mxu0 0.0
        %1571 = vmatpush.msra.mxu0 0.0
        %1572 = vmatpush.msra.mxu0 0.0
        %1573 = vmatpush.msra.mxu0 0.0
        %1574 = vmatpush.msra.mxu0 0.0
        %1575 = vmatpush.msra.mxu0 0.0
        %1576 = vmatpush.msra.mxu0 0.0
        %1577 = vmatpush.msra.mxu0 0.0
        %1578 = vmatpush.msra.mxu0 0.0
        %1579 = vmatpush.msra.mxu0 0.0
        %1580 = vmatpush.msra.mxu0 0.0
        %1581 = vmatpush.msra.mxu0 0.0
        %1582 = vmatpush.msra.mxu0 0.0
        %1583 = vmatpush.msra.mxu0 %v1563
        %1584 = vmatmul.f32.gmra.mxu0 %v1566
        %v1585 = vpop.f32.mrf.mxu0
        %v1586 = vadd.f32 0.0, %v1585
        %1587 = vdwg.mxu0
        %1588 = vrot.lane.b32.xlu0 %v575, 104
        %v1589 = vpop.permute.xlu0 %1588
        %v1592 = vsel %vm584, %v1509, 0
        %1594 = vmatpush.msra.mxu0 0.0
        %1595 = vmatpush.msra.mxu0 0.0
        %1596 = vmatpush.msra.mxu0 0.0
        %1597 = vmatpush.msra.mxu0 0.0
        %1598 = vmatpush.msra.mxu0 0.0
        %1599 = vmatpush.msra.mxu0 0.0
        %1600 = vmatpush.msra.mxu0 0.0
        %1601 = vmatpush.msra.mxu0 0.0
        %1602 = vmatpush.msra.mxu0 0.0
        %1603 = vmatpush.msra.mxu0 0.0
        %1604 = vmatpush.msra.mxu0 0.0
        %1605 = vmatpush.msra.mxu0 0.0
        %1606 = vmatpush.msra.mxu0 0.0
        %1607 = vmatpush.msra.mxu0 0.0
        %1608 = vmatpush.msra.mxu0 0.0
        %1609 = vmatpush.msra.mxu0 %v1589
        %1610 = vmatmul.f32.gmra.mxu0 %v1592
        %v1611 = vpop.f32.mrf.mxu0
        %v1612 = vadd.f32 0.0, %v1611
        %1613 = vdwg.mxu0
        %1618 = vrot.lane.b32.xlu0 %v1011, 8
        %v1619 = vpop.permute.xlu0 %1618
        %1620 = vrot.lane.b32.xlu0 %v1038, 8
        %v1621 = vpop.permute.xlu0 %1620
        %1622 = vrot.lane.b32.xlu0 %v1065, 8
        %v1623 = vpop.permute.xlu0 %1622
        %1624 = vrot.lane.b32.xlu0 %v1092, 8
        %v1625 = vpop.permute.xlu0 %1624
        %1634 = vrot.lane.b32.xlu0 %v1274, 16
        %v1635 = vpop.permute.xlu0 %1634
        %1636 = vrot.lane.b32.xlu0 %v1300, 16
        %v1637 = vpop.permute.xlu0 %1636
        %1638 = vrot.lane.b32.xlu0 %v1326, 16
        %v1639 = vpop.permute.xlu0 %1638
        %1640 = vrot.lane.b32.xlu0 %v1352, 16
        %v1641 = vpop.permute.xlu0 %1640
        %1650 = vrot.lane.b32.xlu0 %v1534, 24
        %v1651 = vpop.permute.xlu0 %1650
        %1652 = vrot.lane.b32.xlu0 %v1560, 24
        %v1653 = vpop.permute.xlu0 %1652
        %1654 = vrot.lane.b32.xlu0 %v1586, 24
        %v1655 = vpop.permute.xlu0 %1654
        %1656 = vrot.lane.b32.xlu0 %v1612, 24
        %v1657 = vpop.permute.xlu0 %1656
        %v1662 = vsel %vm584, %v759, %v1619
        %v1663 = vsel %vm584, %v782, %v1621
        %v1664 = vsel %vm584, %v805, %v1623
        %v1665 = vsel %vm584, %v828, %v1625
        %vm1666 = vcmask 130048
        %v1667 = vsel %vm1666, %v1662, %v1635
        %v1668 = vsel %vm1666, %v1663, %v1637
        %v1669 = vsel %vm1666, %v1664, %v1639
        %v1670 = vsel %vm1666, %v1665, %v1641
        %vm1671 = vcmask 195584
        %v1672 = vsel %vm1671, %v1667, %v1651
        %v1673 = vsel %vm1671, %v1668, %v1653
        %v1674 = vsel %vm1671, %v1669, %v1655
        %v1675 = vsel %vm1671, %v1670, %v1657
        %v1676 = vld [vmem:[#allocation7] sm:$0xff]
        %v1677 = vld [vmem:[#allocation7 + $0x8] sm:$0xff]
        %v1678 = vld [vmem:[#allocation7 + $0x10] sm:$0xff]
        %v1679 = vld [vmem:[#allocation7 + $0x18] sm:$0xff]
        %v1680 = vperm.slane %v480, 1
        %v1682 = vsel %vm489, %v1672, 0
        %v1685 = vsel %vm489, %v1673, 0
        %v1688 = vsel %vm489, %v1674, 0
        %v1691 = vsel %vm489, %v1675, 0
        %1693 = vmatpush.msra.mxu0 0.0
        %1694 = vmatpush.msra.mxu0 0.0
        %1695 = vmatpush.msra.mxu0 0.0
        %1696 = vmatpush.msra.mxu0 0.0
        %1697 = vmatpush.msra.mxu0 0.0
        %1698 = vmatpush.msra.mxu0 0.0
        %1699 = vmatpush.msra.mxu0 0.0
        %1700 = vmatpush.msra.mxu0 0.0
        %1701 = vmatpush.msra.mxu0 0.0
        %1702 = vmatpush.msra.mxu0 0.0
        %1703 = vmatpush.msra.mxu0 0.0
        %1704 = vmatpush.msra.mxu0 0.0
        %1705 = vmatpush.msra.mxu0 %v1679
        %1706 = vmatpush.msra.mxu0 %v1678
        %1707 = vmatpush.msra.mxu0 %v1677
        %1708 = vmatpush.msra.mxu0 %v1676
        %1709 = vmatmul.f32.gmra.mxu0 %v1682
        %v1710 = vpop.f32.mrf.mxu0
        %v1711 = vadd.f32 %v1680, %v1710
        %1712 = vmatmul.f32.gmra.mxu0 %v1685
        %v1713 = vpop.f32.mrf.mxu0
        %v1714 = vadd.f32 %v1680, %v1713
        %1715 = vmatmul.f32.gmra.mxu0 %v1688
        %v1716 = vpop.f32.mrf.mxu0
        %v1717 = vadd.f32 %v1680, %v1716
        %1718 = vmatmul.f32.gmra.mxu0 %v1691
        %v1719 = vpop.f32.mrf.mxu0
        %v1720 = vadd.f32 %v1680, %v1719
        %1721 = vdwg.mxu0
        %v1722 = vadd.f32 %v468, %v1711
        %v1723 = vadd.f32 %v469, %v1714
        %v1724 = vadd.f32 %v470, %v1717
        %v1725 = vadd.f32 %v471, %v1720
        %v1726 = vsel %vm489, %v1722, 0.0
        %1727 = vadd.xlane.f32.xlu0 %v1726
        %v1728 = vpop.xlane.xlu0 %1727
        %v1729 = vsel %vm489, %v1723, 0.0
        %1730 = vadd.xlane.f32.xlu0 %v1729
        %v1731 = vpop.xlane.xlu0 %1730
        %v1732 = vsel %vm489, %v1724, 0.0
        %1733 = vadd.xlane.f32.xlu0 %v1732
        %v1734 = vpop.xlane.xlu0 %1733
        %v1735 = vsel %vm489, %v1725, 0.0
        %1736 = vadd.xlane.f32.xlu0 %v1735
        %v1737 = vpop.xlane.xlu0 %1736
        %v1738 = vrcp.pop 32.0
        %v1739 = vmul.f32 32.0, %v1738
        %v1740 = vsub.f32 1.0, %v1739
        %v1741 = vmul.f32 %v1738, %v1740
        %v1742 = vadd.f32 %v1738, %v1741
        %vm1743 = vweird.f32 %v1738
        %v1744 = vsel %vm1743, %v1738, %v1742
        %v1745 = vmul.f32 %v1728, %v1744
        %v1746 = vmul.f32 %v1731, %v1744
        %v1747 = vmul.f32 %v1734, %v1744
        %v1748 = vmul.f32 %v1737, %v1744
        %v1749 = vsub.f32 %v1722, %v1745
        %v1750 = vsub.f32 %v1723, %v1746
        %v1751 = vsub.f32 %v1724, %v1747
        %v1752 = vsub.f32 %v1725, %v1748
        %v1753 = vmul.f32 %v1749, %v1749
        %v1754 = vmul.f32 %v1750, %v1750
        %v1755 = vmul.f32 %v1751, %v1751
        %v1756 = vmul.f32 %v1752, %v1752
        %v1757 = vsel %vm489, %v1753, 0.0
        %1758 = vadd.xlane.f32.xlu0 %v1757
        %v1759 = vpop.xlane.xlu0 %1758
        %v1760 = vsel %vm489, %v1754, 0.0
        %1761 = vadd.xlane.f32.xlu0 %v1760
        %v1762 = vpop.xlane.xlu0 %1761
        %v1763 = vsel %vm489, %v1755, 0.0
        %1764 = vadd.xlane.f32.xlu0 %v1763
        %v1765 = vpop.xlane.xlu0 %1764
        %v1766 = vsel %vm489, %v1756, 0.0
        %1767 = vadd.xlane.f32.xlu0 %v1766
        %v1768 = vpop.xlane.xlu0 %1767
        %v1769 = vmul.f32 %v1759, %v1744
        %v1770 = vmul.f32 %v1762, %v1744
        %v1771 = vmul.f32 %v1765, %v1744
        %v1772 = vmul.f32 %v1768, %v1744
        %v1773 = vadd.f32 %v1769, 1e-05
        %v1774 = vadd.f32 %v1770, 1e-05
        %v1775 = vadd.f32 %v1771, 1e-05
        %v1776 = vadd.f32 %v1772, 1e-05
        %v1777 = vrsqrt.pop %v1773
        %v1778 = vmul.f32 %v1777, %v1773
        %v1779 = vmul.f32 %v1778, %v1777
        %v1780 = vmul.f32 0.5, %v1779
        %v1781 = vsub.f32 1.5, %v1780
        %v1782 = vmul.f32 %v1777, %v1781
        %vm1783 = vweird.f32 %v1773
        %vm1784 = vweird.f32 %v1777
        %vm1785 = vmor %vm1783, %vm1784
        %v1786 = vsel %vm1785, %v1777, %v1782
        %v1787 = vrsqrt.pop %v1774
        %v1788 = vmul.f32 %v1787, %v1774
        %v1789 = vmul.f32 %v1788, %v1787
        %v1790 = vmul.f32 0.5, %v1789
        %v1791 = vsub.f32 1.5, %v1790
        %v1792 = vmul.f32 %v1787, %v1791
        %vm1793 = vweird.f32 %v1774
        %vm1794 = vweird.f32 %v1787
        %vm1795 = vmor %vm1793, %vm1794
        %v1796 = vsel %vm1795, %v1787, %v1792
        %v1797 = vrsqrt.pop %v1775
        %v1798 = vmul.f32 %v1797, %v1775
        %v1799 = vmul.f32 %v1798, %v1797
        %v1800 = vmul.f32 0.5, %v1799
        %v1801 = vsub.f32 1.5, %v1800
        %v1802 = vmul.f32 %v1797, %v1801
        %vm1803 = vweird.f32 %v1775
        %vm1804 = vweird.f32 %v1797
        %vm1805 = vmor %vm1803, %vm1804
        %v1806 = vsel %vm1805, %v1797, %v1802
        %v1807 = vrsqrt.pop %v1776
        %v1808 = vmul.f32 %v1807, %v1776
        %v1809 = vmul.f32 %v1808, %v1807
        %v1810 = vmul.f32 0.5, %v1809
        %v1811 = vsub.f32 1.5, %v1810
        %v1812 = vmul.f32 %v1807, %v1811
        %vm1813 = vweird.f32 %v1776
        %vm1814 = vweird.f32 %v1807
        %vm1815 = vmor %vm1813, %vm1814
        %v1816 = vsel %vm1815, %v1807, %v1812
        %v1817 = vmul.f32 %v1749, %v1786
        %v1818 = vmul.f32 %v1750, %v1796
        %v1819 = vmul.f32 %v1751, %v1806
        %v1820 = vmul.f32 %v1752, %v1816
        %v1821 = vperm.slane %v480, 3
        %v1822 = vmul.f32 %v1817, %v1821
        %v1823 = vmul.f32 %v1818, %v1821
        %v1824 = vmul.f32 %v1819, %v1821
        %v1825 = vmul.f32 %v1820, %v1821
        %v1826 = vperm.slane %v480, 4
        %v1827 = vadd.f32 %v1822, %v1826
        %v1828 = vadd.f32 %v1823, %v1826
        %v1829 = vadd.f32 %v1824, %v1826
        %v1830 = vadd.f32 %v1825, %v1826
        %v1831 = vld [vmem:[#allocation8] sm:$0xff]
        %v1832 = vld [vmem:[#allocation8 + $0x8] sm:$0xff]
        %v1833 = vld [vmem:[#allocation8 + $0x10] sm:$0xff]
        %v1834 = vld [vmem:[#allocation8 + $0x18] sm:$0xff]
        %v1835 = vld [vmem:[%s8] sm:$0x1]
        %v1837 = vperm.slane %v1835, 0
        %v1840 = vsel %vm489, %v1827, 0
        %v1843 = vsel %vm489, %v1828, 0
        %v1846 = vsel %vm489, %v1829, 0
        %v1849 = vsel %vm489, %v1830, 0
        %1851 = vmatpush.msra.mxu0 0.0
        %1852 = vmatpush.msra.mxu0 0.0
        %1853 = vmatpush.msra.mxu0 0.0
        %1854 = vmatpush.msra.mxu0 0.0
        %1855 = vmatpush.msra.mxu0 0.0
        %1856 = vmatpush.msra.mxu0 0.0
        %1857 = vmatpush.msra.mxu0 0.0
        %1858 = vmatpush.msra.mxu0 0.0
        %1859 = vmatpush.msra.mxu0 0.0
        %1860 = vmatpush.msra.mxu0 0.0
        %1861 = vmatpush.msra.mxu0 0.0
        %1862 = vmatpush.msra.mxu0 0.0
        %1863 = vmatpush.msra.mxu0 %v1834
        %1864 = vmatpush.msra.mxu0 %v1833
        %1865 = vmatpush.msra.mxu0 %v1832
        %1866 = vmatpush.msra.mxu0 %v1831
        %1867 = vmatmul.f32.gmra.mxu0 %v1840
        %v1868 = vpop.f32.mrf.mxu0
        %v1869 = vadd.f32 %v1837, %v1868
        %1870 = vmatmul.f32.gmra.mxu0 %v1843
        %v1871 = vpop.f32.mrf.mxu0
        %v1872 = vadd.f32 %v1837, %v1871
        %1873 = vmatmul.f32.gmra.mxu0 %v1846
        %v1874 = vpop.f32.mrf.mxu0
        %v1875 = vadd.f32 %v1837, %v1874
        %1876 = vmatmul.f32.gmra.mxu0 %v1849
        %v1877 = vpop.f32.mrf.mxu0
        %v1878 = vadd.f32 %v1837, %v1877
        %1879 = vdwg.mxu0
        %v1880 = vmax.f32 %v1869, 0.0
        %v1881 = vmax.f32 %v1872, 0.0
        %v1882 = vmax.f32 %v1875, 0.0
        %v1883 = vmax.f32 %v1878, 0.0
        %v1884 = vld [vmem:[%s6] sm:$0xff]
        %v1885 = vld [vmem:[%s6 + $0x8] sm:$0xff]
        %v1886 = vld [vmem:[%s6 + $0x10] sm:$0xff]
        %v1887 = vld [vmem:[%s6 + $0x18] sm:$0xff]
        %v1888 = vld [vmem:[%s6 + $0x20] sm:$0xff]
        %v1889 = vld [vmem:[%s6 + $0x28] sm:$0xff]
        %v1890 = vld [vmem:[%s6 + $0x30] sm:$0xff]
        %v1891 = vld [vmem:[%s6 + $0x38] sm:$0xff]
        %v1892 = vperm.slane %v480, 2
        %vm1893 = vcmask 523264
        %v1895 = vsel %vm1893, %v1880, 0
        %v1898 = vsel %vm1893, %v1881, 0
        %v1901 = vsel %vm1893, %v1882, 0
        %v1904 = vsel %vm1893, %v1883, 0
        %1906 = vmatpush.msra.mxu0 0.0
        %1907 = vmatpush.msra.mxu0 0.0
        %1908 = vmatpush.msra.mxu0 0.0
        %1909 = vmatpush.msra.mxu0 0.0
        %1910 = vmatpush.msra.mxu0 0.0
        %1911 = vmatpush.msra.mxu0 0.0
        %1912 = vmatpush.msra.mxu0 0.0
        %1913 = vmatpush.msra.mxu0 0.0
        %1914 = vmatpush.msra.mxu0 %v1891
        %1915 = vmatpush.msra.mxu0 %v1890
        %1916 = vmatpush.msra.mxu0 %v1889
        %1917 = vmatpush.msra.mxu0 %v1888
        %1918 = vmatpush.msra.mxu0 %v1887
        %1919 = vmatpush.msra.mxu0 %v1886
        %1920 = vmatpush.msra.mxu0 %v1885
        %1921 = vmatpush.msra.mxu0 %v1884
        %1922 = vmatmul.f32.gmra.mxu0 %v1895
        %v1923 = vpop.f32.mrf.mxu0
        %v1924 = vadd.f32 %v1892, %v1923
        %1925 = vmatmul.f32.gmra.mxu0 %v1898
        %v1926 = vpop.f32.mrf.mxu0
        %v1927 = vadd.f32 %v1892, %v1926
        %1928 = vmatmul.f32.gmra.mxu0 %v1901
        %v1929 = vpop.f32.mrf.mxu0
        %v1930 = vadd.f32 %v1892, %v1929
        %1931 = vmatmul.f32.gmra.mxu0 %v1904
        %v1932 = vpop.f32.mrf.mxu0
        %v1933 = vadd.f32 %v1892, %v1932
        %1934 = vdwg.mxu0
        %v1935 = vadd.f32 %v1827, %v1924
        %v1936 = vadd.f32 %v1828, %v1927
        %v1937 = vadd.f32 %v1829, %v1930
        %v1938 = vadd.f32 %v1830, %v1933
        %v1939 = vsel %vm489, %v1935, 0.0
        %1940 = vadd.xlane.f32.xlu0 %v1939
        %v1941 = vpop.xlane.xlu0 %1940
        %v1942 = vsel %vm489, %v1936, 0.0
        %1943 = vadd.xlane.f32.xlu0 %v1942
        %v1944 = vpop.xlane.xlu0 %1943
        %v1945 = vsel %vm489, %v1937, 0.0
        %1946 = vadd.xlane.f32.xlu0 %v1945
        %v1947 = vpop.xlane.xlu0 %1946
        %v1948 = vsel %vm489, %v1938, 0.0
        %1949 = vadd.xlane.f32.xlu0 %v1948
        %v1950 = vpop.xlane.xlu0 %1949
        %v1951 = vmul.f32 %v1941, %v1744
        %v1952 = vmul.f32 %v1944, %v1744
        %v1953 = vmul.f32 %v1947, %v1744
        %v1954 = vmul.f32 %v1950, %v1744
        %v1955 = vsub.f32 %v1935, %v1951
        %v1956 = vsub.f32 %v1936, %v1952
        %v1957 = vsub.f32 %v1937, %v1953
        %v1958 = vsub.f32 %v1938, %v1954
        %v1959 = vmul.f32 %v1955, %v1955
        %v1960 = vmul.f32 %v1956, %v1956
        %v1961 = vmul.f32 %v1957, %v1957
        %v1962 = vmul.f32 %v1958, %v1958
        %v1963 = vsel %vm489, %v1959, 0.0
        %1964 = vadd.xlane.f32.xlu0 %v1963
        %v1965 = vpop.xlane.xlu0 %1964
        %v1966 = vsel %vm489, %v1960, 0.0
        %1967 = vadd.xlane.f32.xlu0 %v1966
        %v1968 = vpop.xlane.xlu0 %1967
        %v1969 = vsel %vm489, %v1961, 0.0
        %1970 = vadd.xlane.f32.xlu0 %v1969
        %v1971 = vpop.xlane.xlu0 %1970
        %v1972 = vsel %vm489, %v1962, 0.0
        %1973 = vadd.xlane.f32.xlu0 %v1972
        %v1974 = vpop.xlane.xlu0 %1973
        %v1975 = vmul.f32 %v1965, %v1744
        %v1976 = vmul.f32 %v1968, %v1744
        %v1977 = vmul.f32 %v1971, %v1744
        %v1978 = vmul.f32 %v1974, %v1744
        %v1979 = vadd.f32 %v1975, 1e-05
        %v1980 = vadd.f32 %v1976, 1e-05
        %v1981 = vadd.f32 %v1977, 1e-05
        %v1982 = vadd.f32 %v1978, 1e-05
        %v1983 = vrsqrt.pop %v1979
        %v1984 = vmul.f32 %v1983, %v1979
        %v1985 = vmul.f32 %v1984, %v1983
        %v1986 = vmul.f32 0.5, %v1985
        %v1987 = vsub.f32 1.5, %v1986
        %v1988 = vmul.f32 %v1983, %v1987
        %vm1989 = vweird.f32 %v1979
        %vm1990 = vweird.f32 %v1983
        %vm1991 = vmor %vm1989, %vm1990
        %v1992 = vsel %vm1991, %v1983, %v1988
        %v1993 = vrsqrt.pop %v1980
        %v1994 = vmul.f32 %v1993, %v1980
        %v1995 = vmul.f32 %v1994, %v1993
        %v1996 = vmul.f32 0.5, %v1995
        %v1997 = vsub.f32 1.5, %v1996
        %v1998 = vmul.f32 %v1993, %v1997
        %vm1999 = vweird.f32 %v1980
        %vm2000 = vweird.f32 %v1993
        %vm2001 = vmor %vm1999, %vm2000
        %v2002 = vsel %vm2001, %v1993, %v1998
        %v2003 = vrsqrt.pop %v1981
        %v2004 = vmul.f32 %v2003, %v1981
        %v2005 = vmul.f32 %v2004, %v2003
        %v2006 = vmul.f32 0.5, %v2005
        %v2007 = vsub.f32 1.5, %v2006
        %v2008 = vmul.f32 %v2003, %v2007
        %vm2009 = vweird.f32 %v1981
        %vm2010 = vweird.f32 %v2003
        %vm2011 = vmor %vm2009, %vm2010
        %v2012 = vsel %vm2011, %v2003, %v2008
        %v2013 = vrsqrt.pop %v1982
        %v2014 = vmul.f32 %v2013, %v1982
        %v2015 = vmul.f32 %v2014, %v2013
        %v2016 = vmul.f32 0.5, %v2015
        %v2017 = vsub.f32 1.5, %v2016
        %v2018 = vmul.f32 %v2013, %v2017
        %vm2019 = vweird.f32 %v1982
        %vm2020 = vweird.f32 %v2013
        %vm2021 = vmor %vm2019, %vm2020
        %v2022 = vsel %vm2021, %v2013, %v2018
        %v2023 = vmul.f32 %v1955, %v1992
        %v2024 = vmul.f32 %v1956, %v2002
        %v2025 = vmul.f32 %v1957, %v2012
        %v2026 = vmul.f32 %v1958, %v2022
        %v2027 = vperm.slane %v480, 5
        %v2028 = vmul.f32 %v2023, %v2027
        %v2029 = vmul.f32 %v2024, %v2027
        %v2030 = vmul.f32 %v2025, %v2027
        %v2031 = vmul.f32 %v2026, %v2027
        %v2032 = vperm.slane %v480, 6
        %v2033 = vadd.f32 %v2028, %v2032
        %v2034 = vadd.f32 %v2029, %v2032
        %v2035 = vadd.f32 %v2030, %v2032
        %v2036 = vadd.f32 %v2031, %v2032
        %2037 = vst.msk [vmem:[%s459] sm:$0xff] %vm489, %v2033
        %2038 = vst.msk [vmem:[%s459 + $0x8] sm:$0xff] %vm489, %v2034
        %2039 = vst.msk [vmem:[%s459 + $0x10] sm:$0xff] %vm489, %v2035
        %2040 = vst.msk [vmem:[%s459 + $0x18] sm:$0xff] %vm489, %v2036
        %s2041 = sand.u32 %s257, 1
        %s2042 = scalar_lea.sflag [#allocation4], %s2041
        %s2043 = sand.u32 %s257, 1
        %s2044 = smul.addr %s2043, 32
        %s2045 = scalar_lea.vmem [#allocation11], %s2044
        // Predicated region
        $region81: #{tpu_custom_call.1} parent=59 // pred_check
          %p2046 = pneg %p267
        $region82: #{tpu_custom_call.1} parent=59 // pred_check_branch
          %2048 = sbr.rel (%p2046) target = $region84
        $region83: #{tpu_custom_call.1} parent=59 // pred_region
          %s2049 = smul.u32 4, %s29
          %2051 = vsyncadd %s2042, 0
          %s2052 = smul.addr %s2049, 8
          %s2053 = scalar_lea.hbm %s10, %s2052
          %s2054 = sshll.u32 %s2045, 4
          %s2055 = int_to_ptr.vmem [resolvable:$true] %s2054
          %s2056 = sshll.u32 %s2053, 4
          %s2057 = int_to_ptr.hbm [resolvable:$true] %s2056
          %2062 = dma.vmem_to_hbm [thread:$0]  %s2055, 512, %s2057, %s2042, 128, 128, 8
        $region84: #{tpu_custom_call.1} parent=59 // pred_fallthru
          _
      $region60: #{tpu_custom_call.1} parent=5 // pred_fallthru
        _
      %p2063 = scmp.le.s32.totalorder 2, %s24
      // Predicated region
      $region85: #{tpu_custom_call.1} parent=5 // pred_check
        %p2064 = pneg %p2063
      $region86: #{tpu_custom_call.1} parent=5 // pred_check_branch
        %2066 = sbr.rel (%p2064) target = $region88
      $region87: #{tpu_custom_call.1} parent=5 // pred_region
        %s2067 = ssub.s32 %s24, 2
        // Predicated region
        $region89: #{tpu_custom_call.1} parent=87 // pred_check
          %p2068 = pneg %p273
        $region90: #{tpu_custom_call.1} parent=87 // pred_check_branch
          %2070 = sbr.rel (%p2068) target = $region92
        $region91: #{tpu_custom_call.1} parent=87 // pred_region
          %s2071 = sand.u32 %s258, 1
          %s2072 = scalar_lea.sflag [#allocation4], %s2071
          %s2073 = sand.u32 %s258, 1
          %s2074 = smul.addr %s2073, 32
          %s2075 = scalar_lea.vmem [#allocation11], %s2074
          %2077 = dma.done %s2072, 512
        $region92: #{tpu_custom_call.1} parent=87 // pred_fallthru
          _
      $region88: #{tpu_custom_call.1} parent=5 // pred_fallthru
        _
    $region6: #{tpu_custom_call.1} parent=1 // loop_footer
      %s28 = sadd.s32 1, %s24
    $region7: #{tpu_custom_call.1} parent=1 // loop_footer_branch
      %23 = sbr.rel target = $region3
    $region8: #{tpu_custom_call.1} parent=1 // loop_exit
      _
    %2078 = vsyncpa [#allocation3], 1
    %s2079 = scalar_lea.sflag [#allocation3], 1
    %2080 = vsyncpa %s2079, 1
    %2081 = vsyncpa [#allocation6], 1
    %2082 = vsyncpa [#allocation9], 1
    %2083 = vsyncpa [#allocation4], 1
    %s2084 = scalar_lea.sflag [#allocation4], 1
    %2085 = vsyncpa %s2084, 1

</llo_original>
